<compile_context>
chip_gen: v6e
topology: v6e:2x2x1
jax: 0.10.0
libtpu: 0.0.40
codegen_flags: <defaults>
</compile_context>

<pallas_src>
import functools

import jax
import jax.numpy as jnp
from jax.experimental import pallas as pl
from jax.experimental.pallas import tpu as pltpu


def _rup(x, m):
    return ((x + m - 1) // m) * m


def _cdiv(a, b):
    return -(-a // b)


# Tile caps (bytes stay well under the 32 MiB default scoped VMEM on all chips).
_TM_CAP = 512     # activation rows per block (sublane axis)
_TK_CAP = 1024    # contraction block
_TN_CAP = 512     # output-channel block


def _pick_m_tile(M):
    """Rows: multiples of 16 (bf16 sublane packing), tile <= cap, tile | Mp."""
    u = _cdiv(M, 16)
    nb = _cdiv(u, _TM_CAP // 16)
    tu = _cdiv(u, nb)
    return 16 * tu, 16 * tu * nb            # (TM, Mp)


def _pick_k_tile(K):
    u = _cdiv(K, 128)
    nb = _cdiv(u, _TK_CAP // 128)
    tu = _cdiv(u, nb)
    return 128 * tu, 128 * tu * nb           # (TK, Kp)


def _pick_n_tile(N):
    u = _cdiv(N, 128)
    nb = _cdiv(u, _TN_CAP // 128)
    tu = _cdiv(u, nb)
    if nb == 1 and u >= 2 and u % 2 == 0:
        # keep >=2 parallel N blocks (free of extra padding) so the second
        # TensorCore on v7x megacore has work even when M is a single block.
        nb, tu = 2, u // 2
    return 128 * tu, 128 * tu * nb           # (TN, Np)


# ---------------------------------------------------------------------------
# Pallas kernels
# ---------------------------------------------------------------------------
def _mm_bias_kernel(x_ref, w_ref, b_ref, o_ref, acc_ref, *, relu):
    """Tiled bf16 matmul (f32 accumulation) + fused per-column bias + optional ReLU."""
    @pl.when(pl.program_id(2) == 0)
    def _():
        acc_ref[...] = jnp.zeros_like(acc_ref)

    acc_ref[...] += jnp.dot(x_ref[...], w_ref[...],
                            preferred_element_type=jnp.float32)

    @pl.when(pl.program_id(2) == pl.num_programs(2) - 1)
    def _():
        y = acc_ref[...] + b_ref[...]
        if relu:
            y = jnp.maximum(y, 0.0)
        o_ref[...] = y.astype(o_ref.dtype)


@functools.lru_cache(maxsize=None)
def _matmul_fn(Mp, Kp, Np, TM, TK, TN, relu, out_dtype):
    f = pl.pallas_call(
        functools.partial(_mm_bias_kernel, relu=relu),
        out_shape=jax.ShapeDtypeStruct((Mp, Np), out_dtype),
        grid_spec=pltpu.PrefetchScalarGridSpec(
            num_scalar_prefetch=0,
            grid=(Mp // TM, Np // TN, Kp // TK),
            in_specs=[
                pl.BlockSpec((TM, TK), lambda i, j, k: (i, k)),
                pl.BlockSpec((TK, TN), lambda i, j, k: (k, j)),
                pl.BlockSpec((1, TN), lambda i, j, k: (0, j)),
            ],
            out_specs=pl.BlockSpec((TM, TN), lambda i, j, k: (i, j)),
            scratch_shapes=[pltpu.VMEM((TM, TN), jnp.float32)],
        ),
        compiler_params=pltpu.CompilerParams(
            dimension_semantics=("parallel", "parallel", "arbitrary")),
    )
    return jax.jit(f)


def matmul_bias(x, wq, bias, *, TK, TN, relu, out_dtype):
    """out = relu?( x @ wq + bias ).  wq/bias are pre-padded (bf16 / f32);
    x is cast to bf16 and padded on M (to 16-mult) and K here."""
    M, K = x.shape
    Kp, Np = wq.shape
    TM, Mp = _pick_m_tile(M)
    xp = x.astype(jnp.bfloat16)
    if Mp != M or Kp != K:
        xp = jnp.pad(xp, ((0, Mp - M), (0, Kp - K)))
    out = _matmul_fn(Mp, Kp, Np, TM, TK, TN, bool(relu), out_dtype)(xp, wq, bias)
    return out[:M]


def _pool_kernel(x_ref, o_ref, *, op, inv_count):
    """Reduce the window-tap axis (leading dim) with max or mean (count_include_pad)."""
    v = x_ref[...]
    if op == "max":
        o_ref[...] = jnp.max(v, axis=0)
    else:
        o_ref[...] = (jnp.sum(v.astype(jnp.float32), axis=0) * inv_count
                      ).astype(o_ref.dtype)


@functools.lru_cache(maxsize=None)
def _pool_fn(KK, Mp, C, tm, op, inv_count, dtype):
    f = pl.pallas_call(
        functools.partial(_pool_kernel, op=op, inv_count=inv_count),
        out_shape=jax.ShapeDtypeStruct((Mp, C), dtype),
        grid_spec=pltpu.PrefetchScalarGridSpec(
            num_scalar_prefetch=0,
            grid=(Mp // tm,),
            in_specs=[pl.BlockSpec((KK, tm, C), lambda i: (0, i, 0))],
            out_specs=pl.BlockSpec((tm, C), lambda i: (i, 0)),
        ),
        compiler_params=pltpu.CompilerParams(
            dimension_semantics=("parallel",)),
    )
    return jax.jit(f)


# ---------------------------------------------------------------------------
# Layer wrappers (glue: padding / im2col / reshape in JAX, compute in Pallas)
# ---------------------------------------------------------------------------
def pool2d(x, k, stride, padding, op):
    """k x k pooling, NHWC.  'avg' matches F.avg_pool2d(count_include_pad=True).
    (max pool is only ever used with padding=0 in this network.)"""
    B, H, W, C = x.shape
    if padding:
        x = jnp.pad(x, ((0, 0), (padding, padding), (padding, padding), (0, 0)))
        H += 2 * padding
        W += 2 * padding
    Ho = (H - k) // stride + 1
    Wo = (W - k) // stride + 1
    taps = [x[:, i:i + stride * Ho:stride, j:j + stride * Wo:stride, :]
            for i in range(k) for j in range(k)]
    KK = k * k
    stk = jnp.stack(taps, 0).reshape(KK, B * Ho * Wo, C)
    M = B * Ho * Wo
    # rows per block: keep the (KK, tm, C) input block around <= 2 MiB
    row_bytes = KK * C * stk.dtype.itemsize
    cap = max(16, ((2 * 1024 * 1024) // row_bytes) // 16 * 16)
    tm = min(cap, 256, _rup(M, 16))
    Mp = _rup(M, tm)
    if Mp != M:
        stk = jnp.pad(stk, ((0, 0), (0, Mp - M), (0, 0)))
    out = _pool_fn(KK, Mp, C, tm, op, 1.0 / float(KK), stk.dtype)(stk)
    return out[:M].reshape(B, Ho, Wo, C)


def conv_group(x, p):
    """One or more fused BasicConv2d (Conv + BN(eval) + ReLU) sharing the same
    input / kernel / stride / padding.  Returns a single array (group of 1) or a
    list of per-branch outputs (group of >1)."""
    kh, kw = p["kh"], p["kw"]
    sh, sw = p["stride"]
    ph, pw = p["padding"]
    x = x.astype(jnp.bfloat16)
    if ph or pw:
        x = jnp.pad(x, ((0, 0), (ph, ph), (pw, pw), (0, 0)))
    B, H, W, C = x.shape
    Ho = (H - kh) // sh + 1
    Wo = (W - kw) // sw + 1
    if kh == 1 and kw == 1 and sh == 1 and sw == 1:
        patches = x
    else:
        # TODO(synk): im2col still materializes kh*kw shifted bf16 copies of the
        # activation in HBM; a tap-streaming BlockSpec would avoid it, but here
        # activations are small relative to the (bf16) weight traffic.
        taps = [x[:, i:i + sh * Ho:sh, j:j + sw * Wo:sw, :]
                for i in range(kh) for j in range(kw)]
        patches = jnp.concatenate(taps, axis=-1)
    out = matmul_bias(patches.reshape(B * Ho * Wo, kh * kw * C),
                      p["wq"], p["b"], TK=p["TK"], TN=p["TN"],
                      relu=True, out_dtype=jnp.bfloat16)
    outs, off = [], 0
    for c in p["couts"]:
        outs.append(out[:, off:off + c].reshape(B, Ho, Wo, c))
        off += c
    return outs if len(outs) > 1 else outs[0]


# ---------------------------------------------------------------------------
# Parameter initialization (deterministic, synthetic; BN folded, bf16, pre-padded)
# ---------------------------------------------------------------------------
class _Keys:
    def __init__(self, key):
        self._k = key

    def next(self):
        self._k, k = jax.random.split(self._k)
        return k


def _pair(v):
    return (v, v) if isinstance(v, int) else tuple(v)


def init_conv_group(kg, cin, couts, kernel=1, stride=1, padding=0):
    kh, kw = _pair(kernel)
    couts = tuple(int(c) for c in couts)
    eps = 1e-3
    ws, bs = [], []
    for cout in couts:
        fan_in = kh * kw * cin
        w = jax.random.normal(kg.next(), (kh, kw, cin, cout), jnp.float32) \
            * (2.0 / fan_in) ** 0.5
        gamma = jnp.ones((cout,), jnp.float32)
        beta = jnp.zeros((cout,), jnp.float32)
        rmean = jnp.zeros((cout,), jnp.float32)
        rvar = jnp.ones((cout,), jnp.float32)
        scale = gamma / jnp.sqrt(rvar + eps)
        bias = beta - rmean * scale
        ws.append(w.reshape(kh * kw * cin, cout) * scale[None, :])  # fold BN scale
        bs.append(bias)
    w2d = jnp.concatenate(ws, axis=1)
    bias = jnp.concatenate(bs, axis=0)
    K = kh * kw * cin
    N = int(sum(couts))
    TK, Kp = _pick_k_tile(K)
    TN, Np = _pick_n_tile(N)
    wq = jnp.pad(w2d, ((0, Kp - K), (0, Np - N))).astype(jnp.bfloat16)
    bq = jnp.pad(bias, (0, Np - N)).reshape(1, Np).astype(jnp.float32)
    return {"wq": wq, "b": bq, "kh": kh, "kw": kw,
            "stride": _pair(stride), "padding": _pair(padding),
            "couts": couts, "TK": TK, "TN": TN}


def init_basic_conv(kg, cin, cout, kernel, stride=1, padding=0):
    return init_conv_group(kg, cin, (cout,), kernel, stride, padding)


def init_inception_a(kg, cin, pool_features):
    return {
        "first": init_conv_group(kg, cin, (64, 48, 64), 1),   # b1, b5_1, b3_1
        "b5_2": init_basic_conv(kg, 48, 64, 5, padding=2),
        "b3_2": init_basic_conv(kg, 64, 96, 3, padding=1),
        "b3_3": init_basic_conv(kg, 96, 96, 3, padding=1),
        "bp": init_basic_conv(kg, cin, pool_features, 1),
    }


def init_inception_b(kg, cin):
    return {
        "b3": init_basic_conv(kg, cin, 384, 3, stride=2),
        "bd_1": init_basic_conv(kg, cin, 64, 1),
        "bd_2": init_basic_conv(kg, 64, 96, 3, padding=1),
        "bd_3": init_basic_conv(kg, 96, 96, 3, stride=2),
    }


def init_inception_c(kg, cin, c7):
    return {
        "first": init_conv_group(kg, cin, (192, c7, c7), 1),  # b1, b7_1, bd_1
        "b7_2": init_basic_conv(kg, c7, c7, (1, 7), padding=(0, 3)),
        "b7_3": init_basic_conv(kg, c7, 192, (7, 1), padding=(3, 0)),
        "bd_2": init_basic_conv(kg, c7, c7, (7, 1), padding=(3, 0)),
        "bd_3": init_basic_conv(kg, c7, c7, (1, 7), padding=(0, 3)),
        "bd_4": init_basic_conv(kg, c7, c7, (7, 1), padding=(3, 0)),
        "bd_5": init_basic_conv(kg, c7, 192, (1, 7), padding=(0, 3)),
        "bp": init_basic_conv(kg, cin, 192, 1),
    }


def init_inception_d(kg, cin):
    return {
        "first": init_conv_group(kg, cin, (192, 192), 1),      # b3_1, b7_1
        "b3_2": init_basic_conv(kg, 192, 320, 3, stride=2),
        "b7_2": init_basic_conv(kg, 192, 192, (1, 7), padding=(0, 3)),
        "b7_3": init_basic_conv(kg, 192, 192, (7, 1), padding=(3, 0)),
        "b7_4": init_basic_conv(kg, 192, 192, 3, stride=2),
    }


def init_inception_e(kg, cin):
    return {
        "first": init_conv_group(kg, cin, (320, 384, 448), 1),  # b1, b3_1, bd_1
        "b3_2a": init_basic_conv(kg, 384, 384, (1, 3), padding=(0, 1)),
        "b3_2b": init_basic_conv(kg, 384, 384, (3, 1), padding=(1, 0)),
        "bd_2": init_basic_conv(kg, 448, 384, 3, padding=1),
        "bd_3a": init_basic_conv(kg, 384, 384, (1, 3), padding=(0, 1)),
        "bd_3b": init_basic_conv(kg, 384, 384, (3, 1), padding=(1, 0)),
        "bp": init_basic_conv(kg, cin, 192, 1),
    }


def init_inception_v3(key, embedding_dim=128):
    kg = _Keys(key)
    p = {}
    p["Conv2d_1a_3x3"] = init_basic_conv(kg, 3, 32, 3, stride=2)
    p["Conv2d_2a_3x3"] = init_basic_conv(kg, 32, 32, 3)
    p["Conv2d_2b_3x3"] = init_basic_conv(kg, 32, 64, 3, padding=1)
    p["Conv2d_3b_1x1"] = init_basic_conv(kg, 64, 80, 1)
    p["Conv2d_4a_3x3"] = init_basic_conv(kg, 80, 192, 3)
    p["Mixed_5b"] = init_inception_a(kg, 192, 32)
    p["Mixed_5c"] = init_inception_a(kg, 256, 64)
    p["Mixed_5d"] = init_inception_a(kg, 288, 64)
    p["Mixed_6a"] = init_inception_b(kg, 288)
    p["Mixed_6b"] = init_inception_c(kg, 768, 128)
    p["Mixed_6c"] = init_inception_c(kg, 768, 160)
    p["Mixed_6d"] = init_inception_c(kg, 768, 160)
    p["Mixed_6e"] = init_inception_c(kg, 768, 192)
    p["Mixed_7a"] = init_inception_d(kg, 768)
    p["Mixed_7b"] = init_inception_e(kg, 1280)
    p["Mixed_7c"] = init_inception_e(kg, 2048)
    K, N = 2048, embedding_dim
    TK, Kp = _pick_k_tile(K)
    TN, Np = _pick_n_tile(N)
    w = jax.random.normal(kg.next(), (K, N), jnp.float32) * (1.0 / K) ** 0.5
    b = jnp.zeros((N,), jnp.float32)
    p["fc"] = {"wq": jnp.pad(w, ((0, Kp - K), (0, Np - N))).astype(jnp.bfloat16),
               "b": jnp.pad(b, (0, Np - N)).reshape(1, Np),
               "N": N, "TK": TK, "TN": TN}
    return p


# ---------------------------------------------------------------------------
# Inception blocks (forward)
# ---------------------------------------------------------------------------
def inception_a(x, p):
    b1, b5, b3 = conv_group(x, p["first"])
    b5 = conv_group(b5, p["b5_2"])
    b3 = conv_group(conv_group(b3, p["b3_2"]), p["b3_3"])
    bp = conv_group(pool2d(x, 3, 1, 1, "avg"), p["bp"])
    return jnp.concatenate([b1, b5, b3, bp], axis=-1)


def inception_b(x, p):
    b3 = conv_group(x, p["b3"])
    bd = conv_group(conv_group(conv_group(x, p["bd_1"]), p["bd_2"]), p["bd_3"])
    bp = pool2d(x, 3, 2, 0, "max")
    return jnp.concatenate([b3, bd, bp], axis=-1)


def inception_c(x, p):
    b1, b7, bd = conv_group(x, p["first"])
    b7 = conv_group(conv_group(b7, p["b7_2"]), p["b7_3"])
    for name in ("bd_2", "bd_3", "bd_4", "bd_5"):
        bd = conv_group(bd, p[name])
    bp = conv_group(pool2d(x, 3, 1, 1, "avg"), p["bp"])
    return jnp.concatenate([b1, b7, bd, bp], axis=-1)


def inception_d(x, p):
    b3, b7 = conv_group(x, p["first"])
    b3 = conv_group(b3, p["b3_2"])
    for name in ("b7_2", "b7_3", "b7_4"):
        b7 = conv_group(b7, p[name])
    bp = pool2d(x, 3, 2, 0, "max")
    return jnp.concatenate([b3, b7, bp], axis=-1)


def inception_e(x, p):
    b1, b3, bd = conv_group(x, p["first"])
    b3 = jnp.concatenate([conv_group(b3, p["b3_2a"]),
                          conv_group(b3, p["b3_2b"])], axis=-1)
    bd = conv_group(bd, p["bd_2"])
    bd = jnp.concatenate([conv_group(bd, p["bd_3a"]),
                          conv_group(bd, p["bd_3b"])], axis=-1)
    bp = conv_group(pool2d(x, 3, 1, 1, "avg"), p["bp"])
    return jnp.concatenate([b1, b3, bd, bp], axis=-1)


def inception_v3_forward(params, x_nchw):
    """Eval-mode forward of torchvision inception_v3 (transform_input=False)."""
    x = jnp.transpose(x_nchw, (0, 2, 3, 1)).astype(jnp.bfloat16)  # NCHW -> NHWC
    x = conv_group(x, params["Conv2d_1a_3x3"])
    x = conv_group(x, params["Conv2d_2a_3x3"])
    x = conv_group(x, params["Conv2d_2b_3x3"])
    x = pool2d(x, 3, 2, 0, "max")
    x = conv_group(x, params["Conv2d_3b_1x1"])
    x = conv_group(x, params["Conv2d_4a_3x3"])
    x = pool2d(x, 3, 2, 0, "max")
    x = inception_a(x, params["Mixed_5b"])
    x = inception_a(x, params["Mixed_5c"])
    x = inception_a(x, params["Mixed_5d"])
    x = inception_b(x, params["Mixed_6a"])
    x = inception_c(x, params["Mixed_6b"])
    x = inception_c(x, params["Mixed_6c"])
    x = inception_c(x, params["Mixed_6d"])
    x = inception_c(x, params["Mixed_6e"])
    # TODO(synk): training-mode AuxLogits branch (InceptionAux) not implemented;
    # inference-mode forward only (aux is skipped in eval).
    x = inception_d(x, params["Mixed_7a"])
    x = inception_e(x, params["Mixed_7b"])
    x = inception_e(x, params["Mixed_7c"])
    # AdaptiveAvgPool2d((1,1)) == global spatial mean (glue). Dropout is identity in eval.
    x = jnp.mean(x, axis=(1, 2), dtype=jnp.float32)
    fc = params["fc"]
    out = matmul_bias(x, fc["wq"], fc["b"], TK=fc["TK"], TN=fc["TN"],
                      relu=False, out_dtype=jnp.float32)
    return out[:, :fc["N"]]


if __name__ == "__main__":
    key = jax.random.PRNGKey(0)
    pkey, xkey = jax.random.split(key)
    params = init_inception_v3(pkey, embedding_dim=128)
    # InceptionV3 requires spatial >= 75; smallest valid: batch=2, 3 channels, 75x75 (NCHW).
    x = jax.random.normal(xkey, (2, 3, 75, 75), jnp.float32)
    fwd = jax.jit(lambda xx: inception_v3_forward(params, xx))
    out = jax.block_until_ready(fwd(x))
    assert out.shape == (2, 128), out.shape
    print("KERNEL_OK")
</pallas_src>

<mosaic_0001>
module attributes {stable_mosaic.version = 11 : i64} {
  func.func @_mm_bias_kernel(%arg0: i32, %arg1: i32, %arg2: i32, %arg3: memref<464x128xbf16, #tpu.memory_space<vmem>>, %arg4: memref<128x128xbf16, #tpu.memory_space<vmem>>, %arg5: memref<1x128xf32, #tpu.memory_space<vmem>>, %arg6: memref<464x128xbf16, #tpu.memory_space<vmem>>, %arg7: memref<464x128xf32, #tpu.memory_space<vmem>>) attributes {dimension_semantics = [#tpu.dimension_semantics<parallel>, #tpu.dimension_semantics<parallel>, #tpu.dimension_semantics<arbitrary>], iteration_bounds = array<i64: 6, 1, 1>, scalar_prefetch = 0 : i64, scratch_operands = 1 : i64, tpu.core_type = #tpu.core_type<tc>, window_params = [{transform_indices = @transform_0, window_bounds = array<i64: 464, 128>}, {transform_indices = @transform_1, window_bounds = array<i64: 128, 128>}, {transform_indices = @transform_2, window_bounds = array<i64: 1, 128>}, {transform_indices = @transform_3, window_bounds = array<i64: 464, 128>}]} {
    %c0_i32 = arith.constant 0 : i32
    %0 = arith.cmpi eq, %arg2, %c0_i32 : i32
    %1 = arith.extui %0 : i1 to i32
    %c0_i32_0 = arith.constant 0 : i32
    %2 = arith.cmpi ne, %1, %c0_i32_0 : i32
    scf.if %2 {
      %cst_10 = arith.constant 0.000000e+00 : f32
      %12 = vector.broadcast %cst_10 : f32 to vector<464x128xf32>
      %c0_11 = arith.constant 0 : index
      %c0_12 = arith.constant 0 : index
      %13 = vector.load %arg7[%c0_11, %c0_12] : memref<464x128xf32, #tpu.memory_space<vmem>>, vector<464x128xf32>
      tpu.vector_store %arg7[%c0_11, %c0_12], %12 {strides = array<i32>} : memref<464x128xf32, #tpu.memory_space<vmem>>, vector<464x128xf32>,
    } else {
    }
    %c0 = arith.constant 0 : index
    %c0_1 = arith.constant 0 : index
    %3 = vector.load %arg7[%c0, %c0_1] : memref<464x128xf32, #tpu.memory_space<vmem>>, vector<464x128xf32>
    %c0_2 = arith.constant 0 : index
    %c0_3 = arith.constant 0 : index
    %4 = vector.load %arg3[%c0_2, %c0_3] : memref<464x128xbf16, #tpu.memory_space<vmem>>, vector<464x128xbf16>
    %c0_4 = arith.constant 0 : index
    %c0_5 = arith.constant 0 : index
    %5 = vector.load %arg4[%c0_4, %c0_5] : memref<128x128xbf16, #tpu.memory_space<vmem>>, vector<128x128xbf16>
    %cst = arith.constant dense<0.000000e+00> : vector<464x128xf32>
    %6 = tpu.matmul %4, %5, %cst {dimension_numbers = #tpu.dot_dimension_numbers<[1], [0], [0], [1], [0, 0, 1, 1], [], []>} : vector<464x128xbf16>, vector<128x128xbf16>, vector<464x128xf32> -> vector<464x128xf32>
    %7 = arith.addf %3, %6 : vector<464x128xf32>
    %c0_6 = arith.constant 0 : index
    %c0_7 = arith.constant 0 : index
    %8 = vector.load %arg7[%c0_6, %c0_7] : memref<464x128xf32, #tpu.memory_space<vmem>>, vector<464x128xf32>
    tpu.vector_store %arg7[%c0_6, %c0_7], %7 {strides = array<i32>} : memref<464x128xf32, #tpu.memory_space<vmem>>, vector<464x128xf32>,
    %c0_i32_8 = arith.constant 0 : i32
    %9 = arith.cmpi eq, %arg2, %c0_i32_8 : i32
    %10 = arith.extui %9 : i1 to i32
    %c0_i32_9 = arith.constant 0 : i32
    %11 = arith.cmpi ne, %10, %c0_i32_9 : i32
    scf.if %11 {
      %c0_10 = arith.constant 0 : index
      %c0_11 = arith.constant 0 : index
      %12 = vector.load %arg7[%c0_10, %c0_11] : memref<464x128xf32, #tpu.memory_space<vmem>>, vector<464x128xf32>
      %c0_12 = arith.constant 0 : index
      %c0_13 = arith.constant 0 : index
      %13 = vector.load %arg5[%c0_12, %c0_13] : memref<1x128xf32, #tpu.memory_space<vmem>>, vector<1x128xf32>
      %14 = vector.broadcast %13 : vector<1x128xf32> to vector<464x128xf32>
      %15 = arith.addf %12, %14 : vector<464x128xf32>
      %cst_14 = arith.constant 0.000000e+00 : f32
      %16 = vector.broadcast %cst_14 : f32 to vector<464x128xf32>
      %17 = arith.maximumf %15, %16 : vector<464x128xf32>
      %18 = arith.truncf %17 : vector<464x128xf32> to vector<464x128xbf16>
      %c0_15 = arith.constant 0 : index
      %c0_16 = arith.constant 0 : index
      %19 = vector.load %arg6[%c0_15, %c0_16] : memref<464x128xbf16, #tpu.memory_space<vmem>>, vector<464x128xbf16>
      tpu.vector_store %arg6[%c0_15, %c0_16], %18 {strides = array<i32>} : memref<464x128xbf16, #tpu.memory_space<vmem>>, vector<464x128xbf16>,
    } else {
    }
    return
  }
  func.func @transform_0(%arg0: i32, %arg1: i32, %arg2: i32) -> (i32, i32) {
    %c0_i32 = arith.constant 0 : i32
    return %arg0, %arg2 : i32, i32
  }
  func.func @transform_1(%arg0: i32, %arg1: i32, %arg2: i32) -> (i32, i32) {
    %c0_i32 = arith.constant 0 : i32
    return %arg2, %arg1 : i32, i32
  }
  func.func @transform_2(%arg0: i32, %arg1: i32, %arg2: i32) -> (i32, i32) {
    %c0_i32 = arith.constant 0 : i32
    %c0_i32_0 = arith.constant 0 : i32
    return %c0_i32, %arg1 : i32, i32
  }
  func.func @transform_3(%arg0: i32, %arg1: i32, %arg2: i32) -> (i32, i32) {
    %c0_i32 = arith.constant 0 : i32
    return %arg0, %arg1 : i32, i32
  }
}

</mosaic_0001>

<llo_original>
// kernel: tpu_custom_call.1
$region0: #{tpu_custom_call.1}
  #allocation0 [shape = 'u32[]', space=smem, size = 0x4, offset = 0x4, fixed_abs, tag = 'smem constant byte address 0x4 - core index']
  #allocation1 [shape = 'u32[144,128]{1,0:T(1,128)}', space=vmem, size = 0x12000, scoped, tag = 'internal scratch']
  #allocation2 [shape = 'f32[464,128]{1,0:T(8,128)}', space=vmem, size = 0x3a000, scoped, tag = 'scratch operand']
  %s0 = inlined_call_operand.hbm [shape: bf16[2784,128], index: 0, kind: input, shape index: {}]
  %s1 = inlined_call_operand.hbm [shape: bf16[128,128], index: 1, kind: input, shape index: {}]
  %s2 = inlined_call_operand.vmem [shape: f32[1,128], index: 2, kind: input, shape index: {}]
  %s3 = inlined_call_operand.hbm [shape: bf16[2784,128], index: 3, kind: output, shape index: {}]
  %s4 = sld [smem:[#allocation0]]
  $region61: #{tpu_custom_call.1} parent=0
    _
  %s6 = ssub.s32 1, %s4
  %s7 = scalar_select 0, %s6, %s4
  $region1: #{tpu_custom_call.1} parent=0
    #allocation3 [shape = 'u8[237568]{0}', space=vmem, size = 0x3a000, scoped, tag = 'input window, operand 0']
    #allocation4 [shape = 's32[2]{0}', space=sflag, size = 0x8, scoped, tag = 'scoped memory for tpu_custom_call.1']
    #allocation5 [shape = 's32[2]{0}', space=sflag, size = 0x8, scoped, tag = 'scoped memory for tpu_custom_call.1']
    #allocation6 [shape = 'u8[32768]{0}', space=vmem, size = 0x8000, scoped, tag = 'input window, operand 1, single buffered']
    #allocation7 [shape = 's32[1]{0}', space=sflag, size = 0x4, scoped, tag = 'scoped memory for tpu_custom_call.1']
    #allocation8 [shape = 'u8[237568]{0}', space=vmem, size = 0x3a000, scoped, tag = 'output window, operand 0']
    %8 = vsyncpa [#allocation4], 0
    %s9 = scalar_lea.sflag [#allocation4], 1
    %10 = vsyncpa %s9, 0
    %11 = vsyncpa [#allocation7], 0
    %12 = vsyncpa [#allocation5], 0
    %s13 = scalar_lea.sflag [#allocation5], 1
    %14 = vsyncpa %s13, 0
    loop: start=0, step=1, limit=8
    $region2: #{tpu_custom_call.1} parent=1 // loop_pre_header
      _
    $region3: #{tpu_custom_call.1} parent=1 // loop_header
      %s16 = sphi 0, %s20
      %p17 = scmp.ge.s32.totalorder %s16, 8
      %s23 = sphi 0, %s42
      %s24 = sphi 0, %s38
      %s25 = sphi 0, %s34
      %s26 = sphi 0, %s23
      %s27 = sphi 0, %s24
      %s28 = sphi 0, %s25
      %s29 = sphi 0, %s26
      %s30 = sphi 0, %s27
      %s31 = sphi 0, %s28
      %s47 = sphi 0, %s49
      %s50 = sphi 0, %s47
      %s51 = sphi 0, %s50
      %s67 = sphi 0, %s51
      %s75 = sphi 0, %s77
      %s78 = sphi 0, %s75
      %s79 = sphi 0, %s78
      %s95 = sphi 0, %s79
      %s101 = sphi 0, %s103
      %s104 = sphi 0, %s101
      %s105 = sphi 0, %s104
      %s121 = sphi 0, %s105
      %s129 = sphi 0, %s131
      %s132 = sphi 0, %s129
      %s133 = sphi 0, %s132
      %s149 = sphi 0, %s133
    $region4: #{tpu_custom_call.1} parent=1 // loop_header_branch
      %19 = sbr.rel (%p17) target = $region8
    $region5: #{tpu_custom_call.1} parent=1 // loop_body
      %s21 = ssub.s32 %s16, 1
      %s22 = ssub.s32 %s16, 2
      %s32 = sadd.s32 1, %s25
      %p33 = scmp.ge.s32.totalorder %s32, 1
      %s34 = scalar_select %p33, 0, %s32
      %s35 = sadd.s32 1, %s24
      %s36 = scalar_select %p33, %s35, %s24
      %p37 = scmp.ge.s32.totalorder %s36, 1
      %s38 = scalar_select %p37, 0, %s36
      %s39 = sadd.s32 1, %s23
      %s40 = scalar_select %p37, %s39, %s23
      %p41 = scmp.ge.s32.totalorder %s40, 6
      %s42 = scalar_select %p41, 0, %s40
      %s43 = ssub.s32 %s23, %s42
      %s44 = ssub.s32 %s25, %s34
      %s45 = sor.u32 %s43, %s44
      %p46 = scmp.eq.s32.totalorder %s45, 0
      %s48 = sadd.s32 %s47, 1
      %s49 = scalar_select %p46, %s47, %s48
      %p52 = pneg %p46
      %p53 = scmp.eq.s32.totalorder %s16, 5
      %p54 = por %p52, %p53
      %p55 = scmp.ne.s32.totalorder %s47, %s50
      %p56 = scmp.eq.s32.totalorder %s16, 0
      %p57 = por %p55, %p56
      %p58 = scmp.ne.s32.totalorder %s47, %s50
      %p59 = scmp.eq.s32.totalorder %s21, 5
      %p60 = por %p58, %p59
      %p61 = scmp.ne.s32.totalorder %s50, %s51
      %p62 = scmp.eq.s32.totalorder %s21, 0
      %p63 = por %p61, %p62
      %p64 = scmp.ne.s32.totalorder %s50, %s51
      %p65 = scmp.eq.s32.totalorder %s22, 5
      %p66 = por %p64, %p65
      %p68 = scmp.ne.s32.totalorder %s51, %s67
      %p69 = scmp.eq.s32.totalorder %s22, 0
      %p70 = por %p68, %p69
      %s71 = ssub.s32 %s25, %s34
      %s72 = ssub.s32 %s24, %s38
      %s73 = sor.u32 %s71, %s72
      %p74 = scmp.eq.s32.totalorder %s73, 0
      %s76 = sadd.s32 %s75, 1
      %s77 = scalar_select %p74, %s75, %s76
      %p80 = pneg %p74
      %p81 = scmp.eq.s32.totalorder %s16, 5
      %p82 = por %p80, %p81
      %p83 = scmp.ne.s32.totalorder %s75, %s78
      %p84 = scmp.eq.s32.totalorder %s16, 0
      %p85 = por %p83, %p84
      %p86 = scmp.ne.s32.totalorder %s75, %s78
      %p87 = scmp.eq.s32.totalorder %s21, 5
      %p88 = por %p86, %p87
      %p89 = scmp.ne.s32.totalorder %s78, %s79
      %p90 = scmp.eq.s32.totalorder %s21, 0
      %p91 = por %p89, %p90
      %p92 = scmp.ne.s32.totalorder %s78, %s79
      %p93 = scmp.eq.s32.totalorder %s22, 5
      %p94 = por %p92, %p93
      %p96 = scmp.ne.s32.totalorder %s79, %s95
      %p97 = scmp.eq.s32.totalorder %s22, 0
      %p98 = por %p96, %p97
      %s99 = ssub.s32 %s24, %s38
      %p100 = scmp.eq.s32.totalorder %s99, 0
      %s102 = sadd.s32 %s101, 1
      %s103 = scalar_select %p100, %s101, %s102
      %p106 = pneg %p100
      %p107 = scmp.eq.s32.totalorder %s16, 5
      %p108 = por %p106, %p107
      %p109 = scmp.ne.s32.totalorder %s101, %s104
      %p110 = scmp.eq.s32.totalorder %s16, 0
      %p111 = por %p109, %p110
      %p112 = scmp.ne.s32.totalorder %s101, %s104
      %p113 = scmp.eq.s32.totalorder %s21, 5
      %p114 = por %p112, %p113
      %p115 = scmp.ne.s32.totalorder %s104, %s105
      %p116 = scmp.eq.s32.totalorder %s21, 0
      %p117 = por %p115, %p116
      %p118 = scmp.ne.s32.totalorder %s104, %s105
      %p119 = scmp.eq.s32.totalorder %s22, 5
      %p120 = por %p118, %p119
      %p122 = scmp.ne.s32.totalorder %s105, %s121
      %p123 = scmp.eq.s32.totalorder %s22, 0
      %p124 = por %p122, %p123
      %s125 = ssub.s32 %s23, %s42
      %s126 = ssub.s32 %s24, %s38
      %s127 = sor.u32 %s125, %s126
      %p128 = scmp.eq.s32.totalorder %s127, 0
      %s130 = sadd.s32 %s129, 1
      %s131 = scalar_select %p128, %s129, %s130
      %p134 = pneg %p128
      %p135 = scmp.eq.s32.totalorder %s16, 5
      %p136 = por %p134, %p135
      %p137 = scmp.ne.s32.totalorder %s129, %s132
      %p138 = scmp.eq.s32.totalorder %s16, 0
      %p139 = por %p137, %p138
      %p140 = scmp.ne.s32.totalorder %s129, %s132
      %p141 = scmp.eq.s32.totalorder %s21, 5
      %p142 = por %p140, %p141
      %p143 = scmp.ne.s32.totalorder %s132, %s133
      %p144 = scmp.eq.s32.totalorder %s21, 0
      %p145 = por %p143, %p144
      %p146 = scmp.ne.s32.totalorder %s132, %s133
      %p147 = scmp.eq.s32.totalorder %s22, 5
      %p148 = por %p146, %p147
      %p150 = scmp.ne.s32.totalorder %s133, %s149
      %p151 = scmp.eq.s32.totalorder %s22, 0
      %p152 = por %p150, %p151
      %p153 = scmp.le.s32.totalorder 1, %s16
      %p154 = scmp.lt.s32.totalorder %s16, 7
      %p155 = pnand %p153, %p154
      %p156 = pneg %p155
      // Predicated region
      $region9: #{tpu_custom_call.1} parent=5 // pred_check
        _
      $region10: #{tpu_custom_call.1} parent=5 // pred_check_branch
        %158 = sbr.rel (%p155) target = $region12
      $region11: #{tpu_custom_call.1} parent=5 // pred_region
        %s159 = ssub.s32 %s16, 1
        // Predicated region
        $region13: #{tpu_custom_call.1} parent=11 // pred_check
          %p160 = pneg %p91
        $region14: #{tpu_custom_call.1} parent=11 // pred_check_branch
          %162 = sbr.rel (%p160) target = $region16
        $region15: #{tpu_custom_call.1} parent=11 // pred_region
          %s163 = smul.u32 16, %s28
          %s165 = ssub.s32 1024, 1024
          %166 = vsyncadd [#allocation7], %s165
          %s167 = sadd.s32 %s27, %s163
          %s168 = smul.addr %s167, 64
          %s169 = scalar_lea.hbm %s1, %s168
          %s170 = sshll.u32 [#allocation6], 4
          %s171 = int_to_ptr.vmem [resolvable:$true] %s170
          %176 = dma.hbm_to_vmem [thread:$0]  %s169, 1024, %s171, [#allocation7], 64, 64, 4
        $region16: #{tpu_custom_call.1} parent=11 // pred_fallthru
          _
        // Predicated region
        $region17: #{tpu_custom_call.1} parent=11 // pred_check
          %p177 = pneg %p117
        $region18: #{tpu_custom_call.1} parent=11 // pred_check_branch
          %179 = sbr.rel (%p177) target = $region20
        $region19: #{tpu_custom_call.1} parent=11 // pred_region
          %p180 = scmp.lt.s32.totalorder %s27, 0
          %s181 = scalar_select %p180, %s27, 0
          %s182 = scalar_lea.vmem %s2, %s181
        $region20: #{tpu_custom_call.1} parent=11 // pred_fallthru
          _
      $region12: #{tpu_custom_call.1} parent=5 // pred_fallthru
        _
      %p183 = scmp.lt.s32.totalorder %s16, 6
      // Predicated region
      $region21: #{tpu_custom_call.1} parent=5 // pred_check
        %p184 = pneg %p183
      $region22: #{tpu_custom_call.1} parent=5 // pred_check_branch
        %186 = sbr.rel (%p184) target = $region24
      $region23: #{tpu_custom_call.1} parent=5 // pred_region
        // Predicated region
        $region25: #{tpu_custom_call.1} parent=23 // pred_check
          %p187 = pneg %p57
        $region26: #{tpu_custom_call.1} parent=23 // pred_check_branch
          %189 = sbr.rel (%p187) target = $region28
        $region27: #{tpu_custom_call.1} parent=23 // pred_region
          %s190 = sand.u32 %s47, 1
          %s191 = scalar_lea.sflag [#allocation4], %s190
          %s192 = sand.u32 %s47, 1
          %s193 = smul.addr %s192, 232
          %s194 = scalar_lea.vmem [#allocation3], %s193
          %s195 = smul.u32 58, %s23
          %s197 = ssub.s32 3712, 3712
          %198 = vsyncadd %s191, %s197
          %s199 = sadd.s32 %s25, %s195
          %s200 = smul.addr %s199, 64
          %s201 = scalar_lea.hbm %s0, %s200
          %s202 = sshll.u32 %s194, 4
          %s203 = int_to_ptr.vmem [resolvable:$true] %s202
          %208 = dma.hbm_to_vmem [thread:$0]  %s201, 3712, %s203, %s191, 64, 64, 4
        $region28: #{tpu_custom_call.1} parent=23 // pred_fallthru
          _
      $region24: #{tpu_custom_call.1} parent=5 // pred_fallthru
        _
      %p209 = scmp.le.s32.totalorder 1, %s16
      %p210 = scmp.lt.s32.totalorder %s16, 7
      %p211 = pnand %p209, %p210
      %p212 = pneg %p211
      // Predicated region
      $region29: #{tpu_custom_call.1} parent=5 // pred_check
        _
      $region30: #{tpu_custom_call.1} parent=5 // pred_check_branch
        %214 = sbr.rel (%p211) target = $region32
      $region31: #{tpu_custom_call.1} parent=5 // pred_region
        %s215 = ssub.s32 %s16, 1
        %s216 = sand.u32 %s50, 1
        %s217 = scalar_lea.sflag [#allocation4], %s216
        %s218 = sand.u32 %s50, 1
        %s219 = smul.addr %s218, 232
        %s220 = scalar_lea.vmem [#allocation3], %s219
        // Predicated region
        $region33: #{tpu_custom_call.1} parent=31 // pred_check
          %p221 = pneg %p63
        $region34: #{tpu_custom_call.1} parent=31 // pred_check_branch
          %223 = sbr.rel (%p221) target = $region36
        $region35: #{tpu_custom_call.1} parent=31 // pred_region
          %224 = dma.done %s217, 3712
        $region36: #{tpu_custom_call.1} parent=31 // pred_fallthru
          _
        // Predicated region
        $region37: #{tpu_custom_call.1} parent=31 // pred_check
          %p225 = pneg %p91
        $region38: #{tpu_custom_call.1} parent=31 // pred_check_branch
          %227 = sbr.rel (%p225) target = $region40
        $region39: #{tpu_custom_call.1} parent=31 // pred_region
          %228 = dma.done [#allocation7], 1024
        $region40: #{tpu_custom_call.1} parent=31 // pred_fallthru
          _
        %s229 = sand.u32 %s50, 1
        %s230 = scalar_lea.sflag [#allocation4], %s229
        %s231 = sand.u32 %s50, 1
        %s232 = smul.addr %s231, 232
        %s233 = scalar_lea.vmem [#allocation3], %s232
        %p234 = pneg %p63
        %p235 = pneg %p60
        %p236 = pneg %p91
        %p237 = pneg %p88
        %p238 = scmp.lt.s32.totalorder %s27, 0
        %s239 = scalar_select %p238, %s27, 0
        %s240 = scalar_lea.vmem %s2, %s239
        %p241 = pneg %p117
        %p242 = pneg %p114
        %p243 = pneg %p145
        %p244 = pneg %p142
        %s245 = sand.u32 %s132, 1
        %s246 = scalar_lea.sflag [#allocation5], %s245
        %s247 = sand.u32 %s132, 1
        %s248 = smul.addr %s247, 232
        %s249 = scalar_lea.vmem [#allocation8], %s248
        %s250 = smul.u32 58, %s26
        %s251 = smul.u32 16, %s28
        %p252 = scmp.lt.s32.totalorder %s27, 0
        %s253 = scalar_select %p252, %s27, 0
        %s254 = scalar_lea.vmem %s2, %s253
        %s255 = smul.u32 58, %s26
        %p257 = scmp.eq.s32.totalorder %s28, 0
        // Predicated region
        $region41: #{tpu_custom_call.1} parent=31 // pred_check
          %p258 = pneg %p257
        $region42: #{tpu_custom_call.1} parent=31 // pred_check_branch
          %260 = sbr.rel (%p258) target = $region44
        $region43: #{tpu_custom_call.1} parent=31 // pred_region
          %261 = vst [vmem:[#allocation2] sm:$0xff] 0.0
          %262 = vst [vmem:[#allocation2 + $0x8] sm:$0xff] 0.0
          %263 = vst [vmem:[#allocation2 + $0x10] sm:$0xff] 0.0
          %264 = vst [vmem:[#allocation2 + $0x18] sm:$0xff] 0.0
          %265 = vst [vmem:[#allocation2 + $0x20] sm:$0xff] 0.0
          %266 = vst [vmem:[#allocation2 + $0x28] sm:$0xff] 0.0
          %267 = vst [vmem:[#allocation2 + $0x30] sm:$0xff] 0.0
          %268 = vst [vmem:[#allocation2 + $0x38] sm:$0xff] 0.0
          %269 = vst [vmem:[#allocation2 + $0x40] sm:$0xff] 0.0
          %270 = vst [vmem:[#allocation2 + $0x48] sm:$0xff] 0.0
          %271 = vst [vmem:[#allocation2 + $0x50] sm:$0xff] 0.0
          %272 = vst [vmem:[#allocation2 + $0x58] sm:$0xff] 0.0
          %273 = vst [vmem:[#allocation2 + $0x60] sm:$0xff] 0.0
          %274 = vst [vmem:[#allocation2 + $0x68] sm:$0xff] 0.0
          %275 = vst [vmem:[#allocation2 + $0x70] sm:$0xff] 0.0
          %276 = vst [vmem:[#allocation2 + $0x78] sm:$0xff] 0.0
          %277 = vst [vmem:[#allocation2 + $0x80] sm:$0xff] 0.0
          %278 = vst [vmem:[#allocation2 + $0x88] sm:$0xff] 0.0
          %279 = vst [vmem:[#allocation2 + $0x90] sm:$0xff] 0.0
          %280 = vst [vmem:[#allocation2 + $0x98] sm:$0xff] 0.0
          %281 = vst [vmem:[#allocation2 + $0xa0] sm:$0xff] 0.0
          %282 = vst [vmem:[#allocation2 + $0xa8] sm:$0xff] 0.0
          %283 = vst [vmem:[#allocation2 + $0xb0] sm:$0xff] 0.0
          %284 = vst [vmem:[#allocation2 + $0xb8] sm:$0xff] 0.0
          %285 = vst [vmem:[#allocation2 + $0xc0] sm:$0xff] 0.0
          %286 = vst [vmem:[#allocation2 + $0xc8] sm:$0xff] 0.0
          %287 = vst [vmem:[#allocation2 + $0xd0] sm:$0xff] 0.0
          %288 = vst [vmem:[#allocation2 + $0xd8] sm:$0xff] 0.0
          %289 = vst [vmem:[#allocation2 + $0xe0] sm:$0xff] 0.0
          %290 = vst [vmem:[#allocation2 + $0xe8] sm:$0xff] 0.0
          %291 = vst [vmem:[#allocation2 + $0xf0] sm:$0xff] 0.0
          %292 = vst [vmem:[#allocation2 + $0xf8] sm:$0xff] 0.0
          %293 = vst [vmem:[#allocation2 + $0x100] sm:$0xff] 0.0
          %294 = vst [vmem:[#allocation2 + $0x108] sm:$0xff] 0.0
          %295 = vst [vmem:[#allocation2 + $0x110] sm:$0xff] 0.0
          %296 = vst [vmem:[#allocation2 + $0x118] sm:$0xff] 0.0
          %297 = vst [vmem:[#allocation2 + $0x120] sm:$0xff] 0.0
          %298 = vst [vmem:[#allocation2 + $0x128] sm:$0xff] 0.0
          %299 = vst [vmem:[#allocation2 + $0x130] sm:$0xff] 0.0
          %300 = vst [vmem:[#allocation2 + $0x138] sm:$0xff] 0.0
          %301 = vst [vmem:[#allocation2 + $0x140] sm:$0xff] 0.0
          %302 = vst [vmem:[#allocation2 + $0x148] sm:$0xff] 0.0
          %303 = vst [vmem:[#allocation2 + $0x150] sm:$0xff] 0.0
          %304 = vst [vmem:[#allocation2 + $0x158] sm:$0xff] 0.0
          %305 = vst [vmem:[#allocation2 + $0x160] sm:$0xff] 0.0
          %306 = vst [vmem:[#allocation2 + $0x168] sm:$0xff] 0.0
          %307 = vst [vmem:[#allocation2 + $0x170] sm:$0xff] 0.0
          %308 = vst [vmem:[#allocation2 + $0x178] sm:$0xff] 0.0
          %309 = vst [vmem:[#allocation2 + $0x180] sm:$0xff] 0.0
          %310 = vst [vmem:[#allocation2 + $0x188] sm:$0xff] 0.0
          %311 = vst [vmem:[#allocation2 + $0x190] sm:$0xff] 0.0
          %312 = vst [vmem:[#allocation2 + $0x198] sm:$0xff] 0.0
          %313 = vst [vmem:[#allocation2 + $0x1a0] sm:$0xff] 0.0
          %314 = vst [vmem:[#allocation2 + $0x1a8] sm:$0xff] 0.0
          %315 = vst [vmem:[#allocation2 + $0x1b0] sm:$0xff] 0.0
          %316 = vst [vmem:[#allocation2 + $0x1b8] sm:$0xff] 0.0
          %317 = vst [vmem:[#allocation2 + $0x1c0] sm:$0xff] 0.0
          %318 = vst [vmem:[#allocation2 + $0x1c8] sm:$0xff] 0.0
        $region44: #{tpu_custom_call.1} parent=31 // pred_fallthru
          _
        %v319 = vld [vmem:[#allocation2] sm:$0xff]
        %v320 = vld [vmem:[#allocation2 + $0x8] sm:$0xff]
        %v321 = vld [vmem:[#allocation2 + $0x10] sm:$0xff]
        %v322 = vld [vmem:[#allocation2 + $0x18] sm:$0xff]
        %v323 = vld [vmem:[#allocation2 + $0x20] sm:$0xff]
        %v324 = vld [vmem:[#allocation2 + $0x28] sm:$0xff]
        %v325 = vld [vmem:[#allocation2 + $0x30] sm:$0xff]
        %v326 = vld [vmem:[#allocation2 + $0x38] sm:$0xff]
        %v327 = vld [vmem:[#allocation2 + $0x40] sm:$0xff]
        %v328 = vld [vmem:[#allocation2 + $0x48] sm:$0xff]
        %v329 = vld [vmem:[#allocation2 + $0x50] sm:$0xff]
        %v330 = vld [vmem:[#allocation2 + $0x58] sm:$0xff]
        %v331 = vld [vmem:[#allocation2 + $0x60] sm:$0xff]
        %v332 = vld [vmem:[#allocation2 + $0x68] sm:$0xff]
        %v333 = vld [vmem:[#allocation2 + $0x70] sm:$0xff]
        %v334 = vld [vmem:[#allocation2 + $0x78] sm:$0xff]
        %v335 = vld [vmem:[#allocation2 + $0x80] sm:$0xff]
        %v336 = vld [vmem:[#allocation2 + $0x88] sm:$0xff]
        %v337 = vld [vmem:[#allocation2 + $0x90] sm:$0xff]
        %v338 = vld [vmem:[#allocation2 + $0x98] sm:$0xff]
        %v339 = vld [vmem:[#allocation2 + $0xa0] sm:$0xff]
        %v340 = vld [vmem:[#allocation2 + $0xa8] sm:$0xff]
        %v341 = vld [vmem:[#allocation2 + $0xb0] sm:$0xff]
        %v342 = vld [vmem:[#allocation2 + $0xb8] sm:$0xff]
        %v343 = vld [vmem:[#allocation2 + $0xc0] sm:$0xff]
        %v344 = vld [vmem:[#allocation2 + $0xc8] sm:$0xff]
        %v345 = vld [vmem:[#allocation2 + $0xd0] sm:$0xff]
        %v346 = vld [vmem:[#allocation2 + $0xd8] sm:$0xff]
        %v347 = vld [vmem:[#allocation2 + $0xe0] sm:$0xff]
        %v348 = vld [vmem:[#allocation2 + $0xe8] sm:$0xff]
        %v349 = vld [vmem:[#allocation2 + $0xf0] sm:$0xff]
        %v350 = vld [vmem:[#allocation2 + $0xf8] sm:$0xff]
        %v351 = vld [vmem:[#allocation2 + $0x100] sm:$0xff]
        %v352 = vld [vmem:[#allocation2 + $0x108] sm:$0xff]
        %v353 = vld [vmem:[#allocation2 + $0x110] sm:$0xff]
        %v354 = vld [vmem:[#allocation2 + $0x118] sm:$0xff]
        %v355 = vld [vmem:[#allocation2 + $0x120] sm:$0xff]
        %v356 = vld [vmem:[#allocation2 + $0x128] sm:$0xff]
        %v357 = vld [vmem:[#allocation2 + $0x130] sm:$0xff]
        %v358 = vld [vmem:[#allocation2 + $0x138] sm:$0xff]
        %v359 = vld [vmem:[#allocation2 + $0x140] sm:$0xff]
        %v360 = vld [vmem:[#allocation2 + $0x148] sm:$0xff]
        %v361 = vld [vmem:[#allocation2 + $0x150] sm:$0xff]
        %v362 = vld [vmem:[#allocation2 + $0x158] sm:$0xff]
        %v363 = vld [vmem:[#allocation2 + $0x160] sm:$0xff]
        %v364 = vld [vmem:[#allocation2 + $0x168] sm:$0xff]
        %v365 = vld [vmem:[#allocation2 + $0x170] sm:$0xff]
        %v366 = vld [vmem:[#allocation2 + $0x178] sm:$0xff]
        %v367 = vld [vmem:[#allocation2 + $0x180] sm:$0xff]
        %v368 = vld [vmem:[#allocation2 + $0x188] sm:$0xff]
        %v369 = vld [vmem:[#allocation2 + $0x190] sm:$0xff]
        %v370 = vld [vmem:[#allocation2 + $0x198] sm:$0xff]
        %v371 = vld [vmem:[#allocation2 + $0x1a0] sm:$0xff]
        %v372 = vld [vmem:[#allocation2 + $0x1a8] sm:$0xff]
        %v373 = vld [vmem:[#allocation2 + $0x1b0] sm:$0xff]
        %v374 = vld [vmem:[#allocation2 + $0x1b8] sm:$0xff]
        %v375 = vld [vmem:[#allocation2 + $0x1c0] sm:$0xff]
        %v376 = vld [vmem:[#allocation2 + $0x1c8] sm:$0xff]
        %v377 = vld [vmem:[%s220] sm:$0xf]
        %v378 = vld [vmem:[%s220 + $0x4] sm:$0xf]
        %v379 = vld [vmem:[%s220 + $0x8] sm:$0xf]
        %v380 = vld [vmem:[%s220 + $0xc] sm:$0xf]
        %v381 = vld [vmem:[%s220 + $0x10] sm:$0xf]
        %v382 = vld [vmem:[%s220 + $0x14] sm:$0xf]
        %v383 = vld [vmem:[%s220 + $0x18] sm:$0xf]
        %v384 = vld [vmem:[%s220 + $0x1c] sm:$0xf]
        %v385 = vld [vmem:[%s220 + $0x20] sm:$0xf]
        %v386 = vld [vmem:[%s220 + $0x24] sm:$0xf]
        %v387 = vld [vmem:[%s220 + $0x28] sm:$0xf]
        %v388 = vld [vmem:[%s220 + $0x2c] sm:$0xf]
        %v389 = vld [vmem:[%s220 + $0x30] sm:$0xf]
        %v390 = vld [vmem:[%s220 + $0x34] sm:$0xf]
        %v391 = vld [vmem:[%s220 + $0x38] sm:$0xf]
        %v392 = vld [vmem:[%s220 + $0x3c] sm:$0xf]
        %v393 = vld [vmem:[%s220 + $0x40] sm:$0xf]
        %v394 = vld [vmem:[%s220 + $0x44] sm:$0xf]
        %v395 = vld [vmem:[%s220 + $0x48] sm:$0xf]
        %v396 = vld [vmem:[%s220 + $0x4c] sm:$0xf]
        %v397 = vld [vmem:[%s220 + $0x50] sm:$0xf]
        %v398 = vld [vmem:[%s220 + $0x54] sm:$0xf]
        %v399 = vld [vmem:[%s220 + $0x58] sm:$0xf]
        %v400 = vld [vmem:[%s220 + $0x5c] sm:$0xf]
        %v401 = vld [vmem:[%s220 + $0x60] sm:$0xf]
        %v402 = vld [vmem:[%s220 + $0x64] sm:$0xf]
        %v403 = vld [vmem:[%s220 + $0x68] sm:$0xf]
        %v404 = vld [vmem:[%s220 + $0x6c] sm:$0xf]
        %v405 = vld [vmem:[%s220 + $0x70] sm:$0xf]
        %v406 = vld [vmem:[%s220 + $0x74] sm:$0xf]
        %v407 = vld [vmem:[%s220 + $0x78] sm:$0xf]
        %v408 = vld [vmem:[%s220 + $0x7c] sm:$0xf]
        %v409 = vld [vmem:[%s220 + $0x80] sm:$0xf]
        %v410 = vld [vmem:[%s220 + $0x84] sm:$0xf]
        %v411 = vld [vmem:[%s220 + $0x88] sm:$0xf]
        %v412 = vld [vmem:[%s220 + $0x8c] sm:$0xf]
        %v413 = vld [vmem:[%s220 + $0x90] sm:$0xf]
        %v414 = vld [vmem:[%s220 + $0x94] sm:$0xf]
        %v415 = vld [vmem:[%s220 + $0x98] sm:$0xf]
        %v416 = vld [vmem:[%s220 + $0x9c] sm:$0xf]
        %v417 = vld [vmem:[%s220 + $0xa0] sm:$0xf]
        %v418 = vld [vmem:[%s220 + $0xa4] sm:$0xf]
        %v419 = vld [vmem:[%s220 + $0xa8] sm:$0xf]
        %v420 = vld [vmem:[%s220 + $0xac] sm:$0xf]
        %v421 = vld [vmem:[%s220 + $0xb0] sm:$0xf]
        %v422 = vld [vmem:[%s220 + $0xb4] sm:$0xf]
        %v423 = vld [vmem:[%s220 + $0xb8] sm:$0xf]
        %v424 = vld [vmem:[%s220 + $0xbc] sm:$0xf]
        %v425 = vld [vmem:[%s220 + $0xc0] sm:$0xf]
        %v426 = vld [vmem:[%s220 + $0xc4] sm:$0xf]
        %v427 = vld [vmem:[%s220 + $0xc8] sm:$0xf]
        %v428 = vld [vmem:[%s220 + $0xcc] sm:$0xf]
        %v429 = vld [vmem:[%s220 + $0xd0] sm:$0xf]
        %v430 = vld [vmem:[%s220 + $0xd4] sm:$0xf]
        %v431 = vld [vmem:[%s220 + $0xd8] sm:$0xf]
        %v432 = vld [vmem:[%s220 + $0xdc] sm:$0xf]
        %v433 = vld [vmem:[%s220 + $0xe0] sm:$0xf]
        %v434 = vld [vmem:[%s220 + $0xe4] sm:$0xf]
        %v435 = vld [vmem:[#allocation6] sm:$0xf]
        %v436 = vld [vmem:[#allocation6 + $0x4] sm:$0xf]
        %v437 = vld [vmem:[#allocation6 + $0x8] sm:$0xf]
        %v438 = vld [vmem:[#allocation6 + $0xc] sm:$0xf]
        %v439 = vld [vmem:[#allocation6 + $0x10] sm:$0xf]
        %v440 = vld [vmem:[#allocation6 + $0x14] sm:$0xf]
        %v441 = vld [vmem:[#allocation6 + $0x18] sm:$0xf]
        %v442 = vld [vmem:[#allocation6 + $0x1c] sm:$0xf]
        %v443 = vld [vmem:[#allocation6 + $0x20] sm:$0xf]
        %v444 = vld [vmem:[#allocation6 + $0x24] sm:$0xf]
        %v445 = vld [vmem:[#allocation6 + $0x28] sm:$0xf]
        %v446 = vld [vmem:[#allocation6 + $0x2c] sm:$0xf]
        %v447 = vld [vmem:[#allocation6 + $0x30] sm:$0xf]
        %v448 = vld [vmem:[#allocation6 + $0x34] sm:$0xf]
        %v449 = vld [vmem:[#allocation6 + $0x38] sm:$0xf]
        %v450 = vld [vmem:[#allocation6 + $0x3c] sm:$0xf]
        %v509 = vunpack.c.l.b16 %v377
        %v510 = vunpack.c.l.b16 %v378
        %v511 = vunpack.c.l.b16 %v379
        %v512 = vunpack.c.l.b16 %v380
        %v513 = vunpack.c.l.b16 %v381
        %v514 = vunpack.c.l.b16 %v382
        %v515 = vunpack.c.l.b16 %v383
        %v516 = vunpack.c.l.b16 %v384
        %v517 = vunpack.c.l.b16 %v385
        %v518 = vunpack.c.l.b16 %v386
        %v519 = vunpack.c.l.b16 %v387
        %v520 = vunpack.c.l.b16 %v388
        %v521 = vunpack.c.l.b16 %v389
        %v522 = vunpack.c.l.b16 %v390
        %v523 = vunpack.c.l.b16 %v391
        %v524 = vunpack.c.l.b16 %v392
        %v525 = vunpack.c.l.b16 %v393
        %v526 = vunpack.c.l.b16 %v394
        %v527 = vunpack.c.l.b16 %v395
        %v528 = vunpack.c.l.b16 %v396
        %v529 = vunpack.c.l.b16 %v397
        %v530 = vunpack.c.l.b16 %v398
        %v531 = vunpack.c.l.b16 %v399
        %v532 = vunpack.c.l.b16 %v400
        %v533 = vunpack.c.l.b16 %v401
        %v534 = vunpack.c.l.b16 %v402
        %v535 = vunpack.c.l.b16 %v403
        %v536 = vunpack.c.l.b16 %v404
        %v537 = vunpack.c.l.b16 %v405
        %v538 = vunpack.c.l.b16 %v406
        %v539 = vunpack.c.l.b16 %v407
        %v540 = vunpack.c.l.b16 %v408
        %v541 = vunpack.c.l.b16 %v409
        %v542 = vunpack.c.l.b16 %v410
        %v543 = vunpack.c.l.b16 %v411
        %v544 = vunpack.c.l.b16 %v412
        %v545 = vunpack.c.l.b16 %v413
        %v546 = vunpack.c.l.b16 %v414
        %v547 = vunpack.c.l.b16 %v415
        %v548 = vunpack.c.l.b16 %v416
        %v549 = vunpack.c.l.b16 %v417
        %v550 = vunpack.c.l.b16 %v418
        %v551 = vunpack.c.l.b16 %v419
        %v552 = vunpack.c.l.b16 %v420
        %v553 = vunpack.c.l.b16 %v421
        %v554 = vunpack.c.l.b16 %v422
        %v555 = vunpack.c.l.b16 %v423
        %v556 = vunpack.c.l.b16 %v424
        %v557 = vunpack.c.l.b16 %v425
        %v558 = vunpack.c.l.b16 %v426
        %v559 = vunpack.c.l.b16 %v427
        %v560 = vunpack.c.l.b16 %v428
        %v561 = vunpack.c.l.b16 %v429
        %v562 = vunpack.c.l.b16 %v430
        %v563 = vunpack.c.l.b16 %v431
        %v564 = vunpack.c.l.b16 %v432
        %v565 = vunpack.c.l.b16 %v433
        %v566 = vunpack.c.l.b16 %v434
        %v567 = vpack.c.b16 %v510, %v509
        %v568 = vpack.c.b16 %v512, %v511
        %v569 = vpack.c.b16 %v514, %v513
        %v570 = vpack.c.b16 %v516, %v515
        %v571 = vpack.c.b16 %v518, %v517
        %v572 = vpack.c.b16 %v520, %v519
        %v573 = vpack.c.b16 %v522, %v521
        %v574 = vpack.c.b16 %v524, %v523
        %v575 = vpack.c.b16 %v526, %v525
        %v576 = vpack.c.b16 %v528, %v527
        %v577 = vpack.c.b16 %v530, %v529
        %v578 = vpack.c.b16 %v532, %v531
        %v579 = vpack.c.b16 %v534, %v533
        %v580 = vpack.c.b16 %v536, %v535
        %v581 = vpack.c.b16 %v538, %v537
        %v582 = vpack.c.b16 %v540, %v539
        %v583 = vpack.c.b16 %v542, %v541
        %v584 = vpack.c.b16 %v544, %v543
        %v585 = vpack.c.b16 %v546, %v545
        %v586 = vpack.c.b16 %v548, %v547
        %v587 = vpack.c.b16 %v550, %v549
        %v588 = vpack.c.b16 %v552, %v551
        %v589 = vpack.c.b16 %v554, %v553
        %v590 = vpack.c.b16 %v556, %v555
        %v591 = vpack.c.b16 %v558, %v557
        %v592 = vpack.c.b16 %v560, %v559
        %v593 = vpack.c.b16 %v562, %v561
        %v594 = vpack.c.b16 %v564, %v563
        %v595 = vpack.c.b16 %v566, %v565
        %v641 = vunpack.c.l.b16 %v435
        %v642 = vunpack.c.l.b16 %v436
        %v643 = vunpack.c.l.b16 %v437
        %v644 = vunpack.c.l.b16 %v438
        %v645 = vunpack.c.l.b16 %v439
        %v646 = vunpack.c.l.b16 %v440
        %v647 = vunpack.c.l.b16 %v441
        %v648 = vunpack.c.l.b16 %v442
        %v649 = vunpack.c.l.b16 %v443
        %v650 = vunpack.c.l.b16 %v444
        %v651 = vunpack.c.l.b16 %v445
        %v652 = vunpack.c.l.b16 %v446
        %v653 = vunpack.c.l.b16 %v447
        %v654 = vunpack.c.l.b16 %v448
        %v655 = vunpack.c.l.b16 %v449
        %v656 = vunpack.c.l.b16 %v450
        %v657 = vpack.c.b16 %v642, %v641
        %v658 = vpack.c.b16 %v644, %v643
        %v659 = vpack.c.b16 %v646, %v645
        %v660 = vpack.c.b16 %v648, %v647
        %v661 = vpack.c.b16 %v650, %v649
        %v662 = vpack.c.b16 %v652, %v651
        %v663 = vpack.c.b16 %v654, %v653
        %v664 = vpack.c.b16 %v656, %v655
        %673 = vmatprep.subr.bf16.mxu0 0
        %674 = vmatpush1.bf16.msra.mxu0 %v664
        %675 = vmatprep.subr.bf16.mxu0 0
        %676 = vmatpush1.bf16.msra.mxu0 %v663
        %677 = vmatprep.subr.bf16.mxu0 0
        %678 = vmatpush1.bf16.msra.mxu0 %v662
        %679 = vmatprep.subr.bf16.mxu0 0
        %680 = vmatpush1.bf16.msra.mxu0 %v661
        %681 = vmatprep.subr.bf16.mxu0 0
        %682 = vmatpush1.bf16.msra.mxu0 %v660
        %683 = vmatprep.subr.bf16.mxu0 0
        %684 = vmatpush1.bf16.msra.mxu0 %v659
        %685 = vmatprep.subr.bf16.mxu0 0
        %686 = vmatpush1.bf16.msra.mxu0 %v658
        %687 = vmatprep.subr.bf16.mxu0 0
        %688 = vmatpush1.bf16.msra.mxu0 %v657
        %689 = vmatprep.subr.bf16.mxu0 0
        %690 = vmatpush2.bf16.msra.mxu0 0
        %691 = vmatprep.subr.bf16.mxu0 0
        %692 = vmatpush2.bf16.msra.mxu0 0
        %693 = vmatprep.subr.bf16.mxu0 0
        %694 = vmatpush2.bf16.msra.mxu0 0
        %695 = vmatprep.subr.bf16.mxu0 0
        %696 = vmatpush2.bf16.msra.mxu0 0
        %697 = vmatprep.subr.bf16.mxu0 0
        %698 = vmatpush2.bf16.msra.mxu0 0
        %699 = vmatprep.subr.bf16.mxu0 0
        %700 = vmatpush2.bf16.msra.mxu0 0
        %701 = vmatprep.subr.bf16.mxu0 0
        %702 = vmatpush2.bf16.msra.mxu0 0
        %703 = vmatprep.subr.bf16.mxu0 0
        %704 = vmatpush2.bf16.msra.mxu0 0
        %705 = vmatprep.mubr.bf16.mxu0 0
        %706 = vmatmul.mubr.bf16.gmra.mxu0 %v567
        %v707 = vpop.f32.mrf.mxu0
        %v708 = vadd.f32 0.0, %v707
        %v709 = vpop.f32.mrf.mxu0
        %v710 = vpop.f32.mrf.mxu0
        %v711 = vadd.f32 0.0, %v710
        %v712 = vpop.f32.mrf.mxu0
        %713 = vmatprep.mubr.bf16.mxu0 0
        %714 = vmatmul.mubr.bf16.gmra.mxu0 %v568
        %v715 = vpop.f32.mrf.mxu0
        %v716 = vadd.f32 0.0, %v715
        %v717 = vpop.f32.mrf.mxu0
        %v718 = vpop.f32.mrf.mxu0
        %v719 = vadd.f32 0.0, %v718
        %v720 = vpop.f32.mrf.mxu0
        %721 = vmatprep.mubr.bf16.mxu0 0
        %722 = vmatmul.mubr.bf16.gmra.mxu0 %v569
        %v723 = vpop.f32.mrf.mxu0
        %v724 = vadd.f32 0.0, %v723
        %v725 = vpop.f32.mrf.mxu0
        %v726 = vpop.f32.mrf.mxu0
        %v727 = vadd.f32 0.0, %v726
        %v728 = vpop.f32.mrf.mxu0
        %729 = vmatprep.mubr.bf16.mxu0 0
        %730 = vmatmul.mubr.bf16.gmra.mxu0 %v570
        %v731 = vpop.f32.mrf.mxu0
        %v732 = vadd.f32 0.0, %v731
        %v733 = vpop.f32.mrf.mxu0
        %v734 = vpop.f32.mrf.mxu0
        %v735 = vadd.f32 0.0, %v734
        %v736 = vpop.f32.mrf.mxu0
        %737 = vmatprep.mubr.bf16.mxu0 0
        %738 = vmatmul.mubr.bf16.gmra.mxu0 %v571
        %v739 = vpop.f32.mrf.mxu0
        %v740 = vadd.f32 0.0, %v739
        %v741 = vpop.f32.mrf.mxu0
        %v742 = vpop.f32.mrf.mxu0
        %v743 = vadd.f32 0.0, %v742
        %v744 = vpop.f32.mrf.mxu0
        %745 = vmatprep.mubr.bf16.mxu0 0
        %746 = vmatmul.mubr.bf16.gmra.mxu0 %v572
        %v747 = vpop.f32.mrf.mxu0
        %v748 = vadd.f32 0.0, %v747
        %v749 = vpop.f32.mrf.mxu0
        %v750 = vpop.f32.mrf.mxu0
        %v751 = vadd.f32 0.0, %v750
        %v752 = vpop.f32.mrf.mxu0
        %753 = vmatprep.mubr.bf16.mxu0 0
        %754 = vmatmul.mubr.bf16.gmra.mxu0 %v573
        %v755 = vpop.f32.mrf.mxu0
        %v756 = vadd.f32 0.0, %v755
        %v757 = vpop.f32.mrf.mxu0
        %v758 = vpop.f32.mrf.mxu0
        %v759 = vadd.f32 0.0, %v758
        %v760 = vpop.f32.mrf.mxu0
        %761 = vmatprep.mubr.bf16.mxu0 0
        %762 = vmatmul.mubr.bf16.gmra.mxu0 %v574
        %v763 = vpop.f32.mrf.mxu0
        %v764 = vadd.f32 0.0, %v763
        %v765 = vpop.f32.mrf.mxu0
        %v766 = vpop.f32.mrf.mxu0
        %v767 = vadd.f32 0.0, %v766
        %v768 = vpop.f32.mrf.mxu0
        %769 = vmatprep.mubr.bf16.mxu0 0
        %770 = vmatmul.mubr.bf16.gmra.mxu0 %v575
        %v771 = vpop.f32.mrf.mxu0
        %v772 = vadd.f32 0.0, %v771
        %v773 = vpop.f32.mrf.mxu0
        %v774 = vpop.f32.mrf.mxu0
        %v775 = vadd.f32 0.0, %v774
        %v776 = vpop.f32.mrf.mxu0
        %777 = vmatprep.mubr.bf16.mxu0 0
        %778 = vmatmul.mubr.bf16.gmra.mxu0 %v576
        %v779 = vpop.f32.mrf.mxu0
        %v780 = vadd.f32 0.0, %v779
        %v781 = vpop.f32.mrf.mxu0
        %v782 = vpop.f32.mrf.mxu0
        %v783 = vadd.f32 0.0, %v782
        %v784 = vpop.f32.mrf.mxu0
        %785 = vmatprep.mubr.bf16.mxu0 0
        %786 = vmatmul.mubr.bf16.gmra.mxu0 %v577
        %v787 = vpop.f32.mrf.mxu0
        %v788 = vadd.f32 0.0, %v787
        %v789 = vpop.f32.mrf.mxu0
        %v790 = vpop.f32.mrf.mxu0
        %v791 = vadd.f32 0.0, %v790
        %v792 = vpop.f32.mrf.mxu0
        %793 = vmatprep.mubr.bf16.mxu0 0
        %794 = vmatmul.mubr.bf16.gmra.mxu0 %v578
        %v795 = vpop.f32.mrf.mxu0
        %v796 = vadd.f32 0.0, %v795
        %v797 = vpop.f32.mrf.mxu0
        %v798 = vpop.f32.mrf.mxu0
        %v799 = vadd.f32 0.0, %v798
        %v800 = vpop.f32.mrf.mxu0
        %801 = vmatprep.mubr.bf16.mxu0 0
        %802 = vmatmul.mubr.bf16.gmra.mxu0 %v579
        %v803 = vpop.f32.mrf.mxu0
        %v804 = vadd.f32 0.0, %v803
        %v805 = vpop.f32.mrf.mxu0
        %v806 = vpop.f32.mrf.mxu0
        %v807 = vadd.f32 0.0, %v806
        %v808 = vpop.f32.mrf.mxu0
        %809 = vmatprep.mubr.bf16.mxu0 0
        %810 = vmatmul.mubr.bf16.gmra.mxu0 %v580
        %v811 = vpop.f32.mrf.mxu0
        %v812 = vadd.f32 0.0, %v811
        %v813 = vpop.f32.mrf.mxu0
        %v814 = vpop.f32.mrf.mxu0
        %v815 = vadd.f32 0.0, %v814
        %v816 = vpop.f32.mrf.mxu0
        %817 = vmatprep.mubr.bf16.mxu0 0
        %818 = vmatmul.mubr.bf16.gmra.mxu0 %v581
        %v819 = vpop.f32.mrf.mxu0
        %v820 = vadd.f32 0.0, %v819
        %v821 = vpop.f32.mrf.mxu0
        %v822 = vpop.f32.mrf.mxu0
        %v823 = vadd.f32 0.0, %v822
        %v824 = vpop.f32.mrf.mxu0
        %825 = vmatprep.mubr.bf16.mxu0 0
        %826 = vmatmul.mubr.bf16.gmra.mxu0 %v582
        %v827 = vpop.f32.mrf.mxu0
        %v828 = vadd.f32 0.0, %v827
        %v829 = vpop.f32.mrf.mxu0
        %v830 = vpop.f32.mrf.mxu0
        %v831 = vadd.f32 0.0, %v830
        %v832 = vpop.f32.mrf.mxu0
        %833 = vmatprep.mubr.bf16.mxu0 0
        %834 = vmatmul.mubr.bf16.gmra.mxu0 %v583
        %v835 = vpop.f32.mrf.mxu0
        %v836 = vadd.f32 0.0, %v835
        %v837 = vpop.f32.mrf.mxu0
        %v838 = vpop.f32.mrf.mxu0
        %v839 = vadd.f32 0.0, %v838
        %v840 = vpop.f32.mrf.mxu0
        %841 = vmatprep.mubr.bf16.mxu0 0
        %842 = vmatmul.mubr.bf16.gmra.mxu0 %v584
        %v843 = vpop.f32.mrf.mxu0
        %v844 = vadd.f32 0.0, %v843
        %v845 = vpop.f32.mrf.mxu0
        %v846 = vpop.f32.mrf.mxu0
        %v847 = vadd.f32 0.0, %v846
        %v848 = vpop.f32.mrf.mxu0
        %849 = vmatprep.mubr.bf16.mxu0 0
        %850 = vmatmul.mubr.bf16.gmra.mxu0 %v585
        %v851 = vpop.f32.mrf.mxu0
        %v852 = vadd.f32 0.0, %v851
        %v853 = vpop.f32.mrf.mxu0
        %v854 = vpop.f32.mrf.mxu0
        %v855 = vadd.f32 0.0, %v854
        %v856 = vpop.f32.mrf.mxu0
        %857 = vmatprep.mubr.bf16.mxu0 0
        %858 = vmatmul.mubr.bf16.gmra.mxu0 %v586
        %v859 = vpop.f32.mrf.mxu0
        %v860 = vadd.f32 0.0, %v859
        %v861 = vpop.f32.mrf.mxu0
        %v862 = vpop.f32.mrf.mxu0
        %v863 = vadd.f32 0.0, %v862
        %v864 = vpop.f32.mrf.mxu0
        %865 = vmatprep.mubr.bf16.mxu0 0
        %866 = vmatmul.mubr.bf16.gmra.mxu0 %v587
        %v867 = vpop.f32.mrf.mxu0
        %v868 = vadd.f32 0.0, %v867
        %v869 = vpop.f32.mrf.mxu0
        %v870 = vpop.f32.mrf.mxu0
        %v871 = vadd.f32 0.0, %v870
        %v872 = vpop.f32.mrf.mxu0
        %873 = vmatprep.mubr.bf16.mxu0 0
        %874 = vmatmul.mubr.bf16.gmra.mxu0 %v588
        %v875 = vpop.f32.mrf.mxu0
        %v876 = vadd.f32 0.0, %v875
        %v877 = vpop.f32.mrf.mxu0
        %v878 = vpop.f32.mrf.mxu0
        %v879 = vadd.f32 0.0, %v878
        %v880 = vpop.f32.mrf.mxu0
        %881 = vmatprep.mubr.bf16.mxu0 0
        %882 = vmatmul.mubr.bf16.gmra.mxu0 %v589
        %v883 = vpop.f32.mrf.mxu0
        %v884 = vadd.f32 0.0, %v883
        %v885 = vpop.f32.mrf.mxu0
        %v886 = vpop.f32.mrf.mxu0
        %v887 = vadd.f32 0.0, %v886
        %v888 = vpop.f32.mrf.mxu0
        %889 = vmatprep.mubr.bf16.mxu0 0
        %890 = vmatmul.mubr.bf16.gmra.mxu0 %v590
        %v891 = vpop.f32.mrf.mxu0
        %v892 = vadd.f32 0.0, %v891
        %v893 = vpop.f32.mrf.mxu0
        %v894 = vpop.f32.mrf.mxu0
        %v895 = vadd.f32 0.0, %v894
        %v896 = vpop.f32.mrf.mxu0
        %897 = vmatprep.mubr.bf16.mxu0 0
        %898 = vmatmul.mubr.bf16.gmra.mxu0 %v591
        %v899 = vpop.f32.mrf.mxu0
        %v900 = vadd.f32 0.0, %v899
        %v901 = vpop.f32.mrf.mxu0
        %v902 = vpop.f32.mrf.mxu0
        %v903 = vadd.f32 0.0, %v902
        %v904 = vpop.f32.mrf.mxu0
        %905 = vmatprep.mubr.bf16.mxu0 0
        %906 = vmatmul.mubr.bf16.gmra.mxu0 %v592
        %v907 = vpop.f32.mrf.mxu0
        %v908 = vadd.f32 0.0, %v907
        %v909 = vpop.f32.mrf.mxu0
        %v910 = vpop.f32.mrf.mxu0
        %v911 = vadd.f32 0.0, %v910
        %v912 = vpop.f32.mrf.mxu0
        %913 = vmatprep.mubr.bf16.mxu0 0
        %914 = vmatmul.mubr.bf16.gmra.mxu0 %v593
        %v915 = vpop.f32.mrf.mxu0
        %v916 = vadd.f32 0.0, %v915
        %v917 = vpop.f32.mrf.mxu0
        %v918 = vpop.f32.mrf.mxu0
        %v919 = vadd.f32 0.0, %v918
        %v920 = vpop.f32.mrf.mxu0
        %921 = vmatprep.mubr.bf16.mxu0 0
        %922 = vmatmul.mubr.bf16.gmra.mxu0 %v594
        %v923 = vpop.f32.mrf.mxu0
        %v924 = vadd.f32 0.0, %v923
        %v925 = vpop.f32.mrf.mxu0
        %v926 = vpop.f32.mrf.mxu0
        %v927 = vadd.f32 0.0, %v926
        %v928 = vpop.f32.mrf.mxu0
        %929 = vmatprep.mubr.bf16.mxu0 0
        %930 = vmatmul.mubr.bf16.gmra.mxu0 %v595
        %v931 = vpop.f32.mrf.mxu0
        %v932 = vadd.f32 0.0, %v931
        %v933 = vpop.f32.mrf.mxu0
        %v934 = vpop.f32.mrf.mxu0
        %v935 = vadd.f32 0.0, %v934
        %v936 = vpop.f32.mrf.mxu0
        %937 = vdwg.mxu0
        %v938 = vadd.f32 %v319, %v708
        %v939 = vadd.f32 %v320, %v711
        %v940 = vadd.f32 %v321, %v716
        %v941 = vadd.f32 %v322, %v719
        %v942 = vadd.f32 %v323, %v724
        %v943 = vadd.f32 %v324, %v727
        %v944 = vadd.f32 %v325, %v732
        %v945 = vadd.f32 %v326, %v735
        %v946 = vadd.f32 %v327, %v740
        %v947 = vadd.f32 %v328, %v743
        %v948 = vadd.f32 %v329, %v748
        %v949 = vadd.f32 %v330, %v751
        %v950 = vadd.f32 %v331, %v756
        %v951 = vadd.f32 %v332, %v759
        %v952 = vadd.f32 %v333, %v764
        %v953 = vadd.f32 %v334, %v767
        %v954 = vadd.f32 %v335, %v772
        %v955 = vadd.f32 %v336, %v775
        %v956 = vadd.f32 %v337, %v780
        %v957 = vadd.f32 %v338, %v783
        %v958 = vadd.f32 %v339, %v788
        %v959 = vadd.f32 %v340, %v791
        %v960 = vadd.f32 %v341, %v796
        %v961 = vadd.f32 %v342, %v799
        %v962 = vadd.f32 %v343, %v804
        %v963 = vadd.f32 %v344, %v807
        %v964 = vadd.f32 %v345, %v812
        %v965 = vadd.f32 %v346, %v815
        %v966 = vadd.f32 %v347, %v820
        %v967 = vadd.f32 %v348, %v823
        %v968 = vadd.f32 %v349, %v828
        %v969 = vadd.f32 %v350, %v831
        %v970 = vadd.f32 %v351, %v836
        %v971 = vadd.f32 %v352, %v839
        %v972 = vadd.f32 %v353, %v844
        %v973 = vadd.f32 %v354, %v847
        %v974 = vadd.f32 %v355, %v852
        %v975 = vadd.f32 %v356, %v855
        %v976 = vadd.f32 %v357, %v860
        %v977 = vadd.f32 %v358, %v863
        %v978 = vadd.f32 %v359, %v868
        %v979 = vadd.f32 %v360, %v871
        %v980 = vadd.f32 %v361, %v876
        %v981 = vadd.f32 %v362, %v879
        %v982 = vadd.f32 %v363, %v884
        %v983 = vadd.f32 %v364, %v887
        %v984 = vadd.f32 %v365, %v892
        %v985 = vadd.f32 %v366, %v895
        %v986 = vadd.f32 %v367, %v900
        %v987 = vadd.f32 %v368, %v903
        %v988 = vadd.f32 %v369, %v908
        %v989 = vadd.f32 %v370, %v911
        %v990 = vadd.f32 %v371, %v916
        %v991 = vadd.f32 %v372, %v919
        %v992 = vadd.f32 %v373, %v924
        %v993 = vadd.f32 %v374, %v927
        %v994 = vadd.f32 %v375, %v932
        %v995 = vadd.f32 %v376, %v935
        %996 = vst [vmem:[#allocation2] sm:$0xff] %v938
        %997 = vst [vmem:[#allocation2 + $0x8] sm:$0xff] %v939
        %998 = vst [vmem:[#allocation2 + $0x10] sm:$0xff] %v940
        %999 = vst [vmem:[#allocation2 + $0x18] sm:$0xff] %v941
        %1000 = vst [vmem:[#allocation2 + $0x20] sm:$0xff] %v942
        %1001 = vst [vmem:[#allocation2 + $0x28] sm:$0xff] %v943
        %1002 = vst [vmem:[#allocation2 + $0x30] sm:$0xff] %v944
        %1003 = vst [vmem:[#allocation2 + $0x38] sm:$0xff] %v945
        %1004 = vst [vmem:[#allocation2 + $0x40] sm:$0xff] %v946
        %1005 = vst [vmem:[#allocation2 + $0x48] sm:$0xff] %v947
        %1006 = vst [vmem:[#allocation2 + $0x50] sm:$0xff] %v948
        %1007 = vst [vmem:[#allocation2 + $0x58] sm:$0xff] %v949
        %1008 = vst [vmem:[#allocation2 + $0x60] sm:$0xff] %v950
        %1009 = vst [vmem:[#allocation2 + $0x68] sm:$0xff] %v951
        %1010 = vst [vmem:[#allocation2 + $0x70] sm:$0xff] %v952
        %1011 = vst [vmem:[#allocation2 + $0x78] sm:$0xff] %v953
        %1012 = vst [vmem:[#allocation2 + $0x80] sm:$0xff] %v954
        %1013 = vst [vmem:[#allocation2 + $0x88] sm:$0xff] %v955
        %1014 = vst [vmem:[#allocation2 + $0x90] sm:$0xff] %v956
        %1015 = vst [vmem:[#allocation2 + $0x98] sm:$0xff] %v957
        %1016 = vst [vmem:[#allocation2 + $0xa0] sm:$0xff] %v958
        %1017 = vst [vmem:[#allocation2 + $0xa8] sm:$0xff] %v959
        %1018 = vst [vmem:[#allocation2 + $0xb0] sm:$0xff] %v960
        %1019 = vst [vmem:[#allocation2 + $0xb8] sm:$0xff] %v961
        %1020 = vst [vmem:[#allocation2 + $0xc0] sm:$0xff] %v962
        %1021 = vst [vmem:[#allocation2 + $0xc8] sm:$0xff] %v963
        %1022 = vst [vmem:[#allocation2 + $0xd0] sm:$0xff] %v964
        %1023 = vst [vmem:[#allocation2 + $0xd8] sm:$0xff] %v965
        %1024 = vst [vmem:[#allocation2 + $0xe0] sm:$0xff] %v966
        %1025 = vst [vmem:[#allocation2 + $0xe8] sm:$0xff] %v967
        %1026 = vst [vmem:[#allocation2 + $0xf0] sm:$0xff] %v968
        %1027 = vst [vmem:[#allocation2 + $0xf8] sm:$0xff] %v969
        %1028 = vst [vmem:[#allocation2 + $0x100] sm:$0xff] %v970
        %1029 = vst [vmem:[#allocation2 + $0x108] sm:$0xff] %v971
        %1030 = vst [vmem:[#allocation2 + $0x110] sm:$0xff] %v972
        %1031 = vst [vmem:[#allocation2 + $0x118] sm:$0xff] %v973
        %1032 = vst [vmem:[#allocation2 + $0x120] sm:$0xff] %v974
        %1033 = vst [vmem:[#allocation2 + $0x128] sm:$0xff] %v975
        %1034 = vst [vmem:[#allocation2 + $0x130] sm:$0xff] %v976
        %1035 = vst [vmem:[#allocation2 + $0x138] sm:$0xff] %v977
        %1036 = vst [vmem:[#allocation2 + $0x140] sm:$0xff] %v978
        %1037 = vst [vmem:[#allocation2 + $0x148] sm:$0xff] %v979
        %1038 = vst [vmem:[#allocation2 + $0x150] sm:$0xff] %v980
        %1039 = vst [vmem:[#allocation2 + $0x158] sm:$0xff] %v981
        %1040 = vst [vmem:[#allocation2 + $0x160] sm:$0xff] %v982
        %1041 = vst [vmem:[#allocation2 + $0x168] sm:$0xff] %v983
        %1042 = vst [vmem:[#allocation2 + $0x170] sm:$0xff] %v984
        %1043 = vst [vmem:[#allocation2 + $0x178] sm:$0xff] %v985
        %1044 = vst [vmem:[#allocation2 + $0x180] sm:$0xff] %v986
        %1045 = vst [vmem:[#allocation2 + $0x188] sm:$0xff] %v987
        %1046 = vst [vmem:[#allocation2 + $0x190] sm:$0xff] %v988
        %1047 = vst [vmem:[#allocation2 + $0x198] sm:$0xff] %v989
        %1048 = vst [vmem:[#allocation2 + $0x1a0] sm:$0xff] %v990
        %1049 = vst [vmem:[#allocation2 + $0x1a8] sm:$0xff] %v991
        %1050 = vst [vmem:[#allocation2 + $0x1b0] sm:$0xff] %v992
        %1051 = vst [vmem:[#allocation2 + $0x1b8] sm:$0xff] %v993
        %1052 = vst [vmem:[#allocation2 + $0x1c0] sm:$0xff] %v994
        %1053 = vst [vmem:[#allocation2 + $0x1c8] sm:$0xff] %v995
        // Predicated region
        $region45: #{tpu_custom_call.1} parent=31 // pred_check
          %p1054 = pneg %p257
        $region46: #{tpu_custom_call.1} parent=31 // pred_check_branch
          %1056 = sbr.rel (%p1054) target = $region48
        $region47: #{tpu_custom_call.1} parent=31 // pred_region
          %v1057 = vld [vmem:[#allocation2] sm:$0xff]
          %v1058 = vld [vmem:[#allocation2 + $0x8] sm:$0xff]
          %v1059 = vld [vmem:[#allocation2 + $0x10] sm:$0xff]
          %v1060 = vld [vmem:[#allocation2 + $0x18] sm:$0xff]
          %v1061 = vld [vmem:[#allocation2 + $0x20] sm:$0xff]
          %v1062 = vld [vmem:[#allocation2 + $0x28] sm:$0xff]
          %v1063 = vld [vmem:[#allocation2 + $0x30] sm:$0xff]
          %v1064 = vld [vmem:[#allocation2 + $0x38] sm:$0xff]
          %v1065 = vld [vmem:[#allocation2 + $0x40] sm:$0xff]
          %v1066 = vld [vmem:[#allocation2 + $0x48] sm:$0xff]
          %v1067 = vld [vmem:[#allocation2 + $0x50] sm:$0xff]
          %v1068 = vld [vmem:[#allocation2 + $0x58] sm:$0xff]
          %v1069 = vld [vmem:[#allocation2 + $0x60] sm:$0xff]
          %v1070 = vld [vmem:[#allocation2 + $0x68] sm:$0xff]
          %v1071 = vld [vmem:[#allocation2 + $0x70] sm:$0xff]
          %v1072 = vld [vmem:[#allocation2 + $0x78] sm:$0xff]
          %v1073 = vld [vmem:[#allocation2 + $0x80] sm:$0xff]
          %v1074 = vld [vmem:[#allocation2 + $0x88] sm:$0xff]
          %v1075 = vld [vmem:[#allocation2 + $0x90] sm:$0xff]
          %v1076 = vld [vmem:[#allocation2 + $0x98] sm:$0xff]
          %v1077 = vld [vmem:[#allocation2 + $0xa0] sm:$0xff]
          %v1078 = vld [vmem:[#allocation2 + $0xa8] sm:$0xff]
          %v1079 = vld [vmem:[#allocation2 + $0xb0] sm:$0xff]
          %v1080 = vld [vmem:[#allocation2 + $0xb8] sm:$0xff]
          %v1081 = vld [vmem:[#allocation2 + $0xc0] sm:$0xff]
          %v1082 = vld [vmem:[#allocation2 + $0xc8] sm:$0xff]
          %v1083 = vld [vmem:[#allocation2 + $0xd0] sm:$0xff]
          %v1084 = vld [vmem:[#allocation2 + $0xd8] sm:$0xff]
          %v1085 = vld [vmem:[#allocation2 + $0xe0] sm:$0xff]
          %v1086 = vld [vmem:[#allocation2 + $0xe8] sm:$0xff]
          %v1087 = vld [vmem:[#allocation2 + $0xf0] sm:$0xff]
          %v1088 = vld [vmem:[#allocation2 + $0xf8] sm:$0xff]
          %v1089 = vld [vmem:[#allocation2 + $0x100] sm:$0xff]
          %v1090 = vld [vmem:[#allocation2 + $0x108] sm:$0xff]
          %v1091 = vld [vmem:[#allocation2 + $0x110] sm:$0xff]
          %v1092 = vld [vmem:[#allocation2 + $0x118] sm:$0xff]
          %v1093 = vld [vmem:[#allocation2 + $0x120] sm:$0xff]
          %v1094 = vld [vmem:[#allocation2 + $0x128] sm:$0xff]
          %v1095 = vld [vmem:[#allocation2 + $0x130] sm:$0xff]
          %v1096 = vld [vmem:[#allocation2 + $0x138] sm:$0xff]
          %v1097 = vld [vmem:[#allocation2 + $0x140] sm:$0xff]
          %v1098 = vld [vmem:[#allocation2 + $0x148] sm:$0xff]
          %v1099 = vld [vmem:[#allocation2 + $0x150] sm:$0xff]
          %v1100 = vld [vmem:[#allocation2 + $0x158] sm:$0xff]
          %v1101 = vld [vmem:[#allocation2 + $0x160] sm:$0xff]
          %v1102 = vld [vmem:[#allocation2 + $0x168] sm:$0xff]
          %v1103 = vld [vmem:[#allocation2 + $0x170] sm:$0xff]
          %v1104 = vld [vmem:[#allocation2 + $0x178] sm:$0xff]
          %v1105 = vld [vmem:[#allocation2 + $0x180] sm:$0xff]
          %v1106 = vld [vmem:[#allocation2 + $0x188] sm:$0xff]
          %v1107 = vld [vmem:[#allocation2 + $0x190] sm:$0xff]
          %v1108 = vld [vmem:[#allocation2 + $0x198] sm:$0xff]
          %v1109 = vld [vmem:[#allocation2 + $0x1a0] sm:$0xff]
          %v1110 = vld [vmem:[#allocation2 + $0x1a8] sm:$0xff]
          %v1111 = vld [vmem:[#allocation2 + $0x1b0] sm:$0xff]
          %v1112 = vld [vmem:[#allocation2 + $0x1b8] sm:$0xff]
          %v1113 = vld [vmem:[#allocation2 + $0x1c0] sm:$0xff]
          %v1114 = vld [vmem:[#allocation2 + $0x1c8] sm:$0xff]
          %v1115 = vld [vmem:[%s254] sm:$0x1]
          %v1117 = vlaneseq
          %v1118 = vshrl.u32 %v1117, 7
          %v1119 = vsub.s32 0, %v1118
          %v1120 = vrot.slane %v1115, %v1119
          %v1122 = vadd.f32 %v1057, %v1120
          %v1123 = vadd.f32 %v1058, %v1120
          %v1124 = vadd.f32 %v1059, %v1120
          %v1125 = vadd.f32 %v1060, %v1120
          %v1126 = vadd.f32 %v1061, %v1120
          %v1127 = vadd.f32 %v1062, %v1120
          %v1128 = vadd.f32 %v1063, %v1120
          %v1129 = vadd.f32 %v1064, %v1120
          %v1130 = vadd.f32 %v1065, %v1120
          %v1131 = vadd.f32 %v1066, %v1120
          %v1132 = vadd.f32 %v1067, %v1120
          %v1133 = vadd.f32 %v1068, %v1120
          %v1134 = vadd.f32 %v1069, %v1120
          %v1135 = vadd.f32 %v1070, %v1120
          %v1136 = vadd.f32 %v1071, %v1120
          %v1137 = vadd.f32 %v1072, %v1120
          %v1138 = vadd.f32 %v1073, %v1120
          %v1139 = vadd.f32 %v1074, %v1120
          %v1140 = vadd.f32 %v1075, %v1120
          %v1141 = vadd.f32 %v1076, %v1120
          %v1142 = vadd.f32 %v1077, %v1120
          %v1143 = vadd.f32 %v1078, %v1120
          %v1144 = vadd.f32 %v1079, %v1120
          %v1145 = vadd.f32 %v1080, %v1120
          %v1146 = vadd.f32 %v1081, %v1120
          %v1147 = vadd.f32 %v1082, %v1120
          %v1148 = vadd.f32 %v1083, %v1120
          %v1149 = vadd.f32 %v1084, %v1120
          %v1150 = vadd.f32 %v1085, %v1120
          %v1151 = vadd.f32 %v1086, %v1120
          %v1152 = vadd.f32 %v1087, %v1120
          %v1153 = vadd.f32 %v1088, %v1120
          %v1154 = vadd.f32 %v1089, %v1120
          %v1155 = vadd.f32 %v1090, %v1120
          %v1156 = vadd.f32 %v1091, %v1120
          %v1157 = vadd.f32 %v1092, %v1120
          %v1158 = vadd.f32 %v1093, %v1120
          %v1159 = vadd.f32 %v1094, %v1120
          %v1160 = vadd.f32 %v1095, %v1120
          %v1161 = vadd.f32 %v1096, %v1120
          %v1162 = vadd.f32 %v1097, %v1120
          %v1163 = vadd.f32 %v1098, %v1120
          %v1164 = vadd.f32 %v1099, %v1120
          %v1165 = vadd.f32 %v1100, %v1120
          %v1166 = vadd.f32 %v1101, %v1120
          %v1167 = vadd.f32 %v1102, %v1120
          %v1168 = vadd.f32 %v1103, %v1120
          %v1169 = vadd.f32 %v1104, %v1120
          %v1170 = vadd.f32 %v1105, %v1120
          %v1171 = vadd.f32 %v1106, %v1120
          %v1172 = vadd.f32 %v1107, %v1120
          %v1173 = vadd.f32 %v1108, %v1120
          %v1174 = vadd.f32 %v1109, %v1120
          %v1175 = vadd.f32 %v1110, %v1120
          %v1176 = vadd.f32 %v1111, %v1120
          %v1177 = vadd.f32 %v1112, %v1120
          %v1178 = vadd.f32 %v1113, %v1120
          %v1179 = vadd.f32 %v1114, %v1120
          %v1180 = vmax.f32 %v1122, 0.0
          %v1181 = vmax.f32 %v1123, 0.0
          %v1182 = vmax.f32 %v1124, 0.0
          %v1183 = vmax.f32 %v1125, 0.0
          %v1184 = vmax.f32 %v1126, 0.0
          %v1185 = vmax.f32 %v1127, 0.0
          %v1186 = vmax.f32 %v1128, 0.0
          %v1187 = vmax.f32 %v1129, 0.0
          %v1188 = vmax.f32 %v1130, 0.0
          %v1189 = vmax.f32 %v1131, 0.0
          %v1190 = vmax.f32 %v1132, 0.0
          %v1191 = vmax.f32 %v1133, 0.0
          %v1192 = vmax.f32 %v1134, 0.0
          %v1193 = vmax.f32 %v1135, 0.0
          %v1194 = vmax.f32 %v1136, 0.0
          %v1195 = vmax.f32 %v1137, 0.0
          %v1196 = vmax.f32 %v1138, 0.0
          %v1197 = vmax.f32 %v1139, 0.0
          %v1198 = vmax.f32 %v1140, 0.0
          %v1199 = vmax.f32 %v1141, 0.0
          %v1200 = vmax.f32 %v1142, 0.0
          %v1201 = vmax.f32 %v1143, 0.0
          %v1202 = vmax.f32 %v1144, 0.0
          %v1203 = vmax.f32 %v1145, 0.0
          %v1204 = vmax.f32 %v1146, 0.0
          %v1205 = vmax.f32 %v1147, 0.0
          %v1206 = vmax.f32 %v1148, 0.0
          %v1207 = vmax.f32 %v1149, 0.0
          %v1208 = vmax.f32 %v1150, 0.0
          %v1209 = vmax.f32 %v1151, 0.0
          %v1210 = vmax.f32 %v1152, 0.0
          %v1211 = vmax.f32 %v1153, 0.0
          %v1212 = vmax.f32 %v1154, 0.0
          %v1213 = vmax.f32 %v1155, 0.0
          %v1214 = vmax.f32 %v1156, 0.0
          %v1215 = vmax.f32 %v1157, 0.0
          %v1216 = vmax.f32 %v1158, 0.0
          %v1217 = vmax.f32 %v1159, 0.0
          %v1218 = vmax.f32 %v1160, 0.0
          %v1219 = vmax.f32 %v1161, 0.0
          %v1220 = vmax.f32 %v1162, 0.0
          %v1221 = vmax.f32 %v1163, 0.0
          %v1222 = vmax.f32 %v1164, 0.0
          %v1223 = vmax.f32 %v1165, 0.0
          %v1224 = vmax.f32 %v1166, 0.0
          %v1225 = vmax.f32 %v1167, 0.0
          %v1226 = vmax.f32 %v1168, 0.0
          %v1227 = vmax.f32 %v1169, 0.0
          %v1228 = vmax.f32 %v1170, 0.0
          %v1229 = vmax.f32 %v1171, 0.0
          %v1230 = vmax.f32 %v1172, 0.0
          %v1231 = vmax.f32 %v1173, 0.0
          %v1232 = vmax.f32 %v1174, 0.0
          %v1233 = vmax.f32 %v1175, 0.0
          %v1234 = vmax.f32 %v1176, 0.0
          %v1235 = vmax.f32 %v1177, 0.0
          %v1236 = vmax.f32 %v1178, 0.0
          %v1237 = vmax.f32 %v1179, 0.0
          %v1238 = vpack.c.bf16 %v1181, %v1180
          %v1239 = vpack.c.bf16 %v1183, %v1182
          %v1240 = vpack.c.bf16 %v1185, %v1184
          %v1241 = vpack.c.bf16 %v1187, %v1186
          %v1242 = vpack.c.bf16 %v1189, %v1188
          %v1243 = vpack.c.bf16 %v1191, %v1190
          %v1244 = vpack.c.bf16 %v1193, %v1192
          %v1245 = vpack.c.bf16 %v1195, %v1194
          %v1246 = vpack.c.bf16 %v1197, %v1196
          %v1247 = vpack.c.bf16 %v1199, %v1198
          %v1248 = vpack.c.bf16 %v1201, %v1200
          %v1249 = vpack.c.bf16 %v1203, %v1202
          %v1250 = vpack.c.bf16 %v1205, %v1204
          %v1251 = vpack.c.bf16 %v1207, %v1206
          %v1252 = vpack.c.bf16 %v1209, %v1208
          %v1253 = vpack.c.bf16 %v1211, %v1210
          %v1254 = vpack.c.bf16 %v1213, %v1212
          %v1255 = vpack.c.bf16 %v1215, %v1214
          %v1256 = vpack.c.bf16 %v1217, %v1216
          %v1257 = vpack.c.bf16 %v1219, %v1218
          %v1258 = vpack.c.bf16 %v1221, %v1220
          %v1259 = vpack.c.bf16 %v1223, %v1222
          %v1260 = vpack.c.bf16 %v1225, %v1224
          %v1261 = vpack.c.bf16 %v1227, %v1226
          %v1262 = vpack.c.bf16 %v1229, %v1228
          %v1263 = vpack.c.bf16 %v1231, %v1230
          %v1264 = vpack.c.bf16 %v1233, %v1232
          %v1265 = vpack.c.bf16 %v1235, %v1234
          %v1266 = vpack.c.bf16 %v1237, %v1236
          %v1296 = vunpack.c.l.b16 %v1238
          %v1297 = vunpack.c.h.b16 %v1238
          %v1298 = vunpack.c.l.b16 %v1239
          %v1299 = vunpack.c.h.b16 %v1239
          %v1300 = vunpack.c.l.b16 %v1240
          %v1301 = vunpack.c.h.b16 %v1240
          %v1302 = vunpack.c.l.b16 %v1241
          %v1303 = vunpack.c.h.b16 %v1241
          %v1304 = vunpack.c.l.b16 %v1242
          %v1305 = vunpack.c.h.b16 %v1242
          %v1306 = vunpack.c.l.b16 %v1243
          %v1307 = vunpack.c.h.b16 %v1243
          %v1308 = vunpack.c.l.b16 %v1244
          %v1309 = vunpack.c.h.b16 %v1244
          %v1310 = vunpack.c.l.b16 %v1245
          %v1311 = vunpack.c.h.b16 %v1245
          %v1312 = vunpack.c.l.b16 %v1246
          %v1313 = vunpack.c.h.b16 %v1246
          %v1314 = vunpack.c.l.b16 %v1247
          %v1315 = vunpack.c.h.b16 %v1247
          %v1316 = vunpack.c.l.b16 %v1248
          %v1317 = vunpack.c.h.b16 %v1248
          %v1318 = vunpack.c.l.b16 %v1249
          %v1319 = vunpack.c.h.b16 %v1249
          %v1320 = vunpack.c.l.b16 %v1250
          %v1321 = vunpack.c.h.b16 %v1250
          %v1322 = vunpack.c.l.b16 %v1251
          %v1323 = vunpack.c.h.b16 %v1251
          %v1324 = vunpack.c.l.b16 %v1252
          %v1325 = vunpack.c.h.b16 %v1252
          %v1326 = vunpack.c.l.b16 %v1253
          %v1327 = vunpack.c.h.b16 %v1253
          %v1328 = vunpack.c.l.b16 %v1254
          %v1329 = vunpack.c.h.b16 %v1254
          %v1330 = vunpack.c.l.b16 %v1255
          %v1331 = vunpack.c.h.b16 %v1255
          %v1332 = vunpack.c.l.b16 %v1256
          %v1333 = vunpack.c.h.b16 %v1256
          %v1334 = vunpack.c.l.b16 %v1257
          %v1335 = vunpack.c.h.b16 %v1257
          %v1336 = vunpack.c.l.b16 %v1258
          %v1337 = vunpack.c.h.b16 %v1258
          %v1338 = vunpack.c.l.b16 %v1259
          %v1339 = vunpack.c.h.b16 %v1259
          %v1340 = vunpack.c.l.b16 %v1260
          %v1341 = vunpack.c.h.b16 %v1260
          %v1342 = vunpack.c.l.b16 %v1261
          %v1343 = vunpack.c.h.b16 %v1261
          %v1344 = vunpack.c.l.b16 %v1262
          %v1345 = vunpack.c.h.b16 %v1262
          %v1346 = vunpack.c.l.b16 %v1263
          %v1347 = vunpack.c.h.b16 %v1263
          %v1348 = vunpack.c.l.b16 %v1264
          %v1349 = vunpack.c.h.b16 %v1264
          %v1350 = vunpack.c.l.b16 %v1265
          %v1351 = vunpack.c.h.b16 %v1265
          %v1352 = vunpack.c.l.b16 %v1266
          %v1353 = vunpack.c.h.b16 %v1266
          %v1354 = vpack.c.b16 %v1296, %v1296
          %v1355 = vpack.c.b16 %v1297, %v1297
          %v1356 = vpack.c.b16 %v1298, %v1298
          %v1357 = vpack.c.b16 %v1299, %v1299
          %v1358 = vpack.c.b16 %v1300, %v1300
          %v1359 = vpack.c.b16 %v1301, %v1301
          %v1360 = vpack.c.b16 %v1302, %v1302
          %v1361 = vpack.c.b16 %v1303, %v1303
          %v1362 = vpack.c.b16 %v1304, %v1304
          %v1363 = vpack.c.b16 %v1305, %v1305
          %v1364 = vpack.c.b16 %v1306, %v1306
          %v1365 = vpack.c.b16 %v1307, %v1307
          %v1366 = vpack.c.b16 %v1308, %v1308
          %v1367 = vpack.c.b16 %v1309, %v1309
          %v1368 = vpack.c.b16 %v1310, %v1310
          %v1369 = vpack.c.b16 %v1311, %v1311
          %v1370 = vpack.c.b16 %v1312, %v1312
          %v1371 = vpack.c.b16 %v1313, %v1313
          %v1372 = vpack.c.b16 %v1314, %v1314
          %v1373 = vpack.c.b16 %v1315, %v1315
          %v1374 = vpack.c.b16 %v1316, %v1316
          %v1375 = vpack.c.b16 %v1317, %v1317
          %v1376 = vpack.c.b16 %v1318, %v1318
          %v1377 = vpack.c.b16 %v1319, %v1319
          %v1378 = vpack.c.b16 %v1320, %v1320
          %v1379 = vpack.c.b16 %v1321, %v1321
          %v1380 = vpack.c.b16 %v1322, %v1322
          %v1381 = vpack.c.b16 %v1323, %v1323
          %v1382 = vpack.c.b16 %v1324, %v1324
          %v1383 = vpack.c.b16 %v1325, %v1325
          %v1384 = vpack.c.b16 %v1326, %v1326
          %v1385 = vpack.c.b16 %v1327, %v1327
          %v1386 = vpack.c.b16 %v1328, %v1328
          %v1387 = vpack.c.b16 %v1329, %v1329
          %v1388 = vpack.c.b16 %v1330, %v1330
          %v1389 = vpack.c.b16 %v1331, %v1331
          %v1390 = vpack.c.b16 %v1332, %v1332
          %v1391 = vpack.c.b16 %v1333, %v1333
          %v1392 = vpack.c.b16 %v1334, %v1334
          %v1393 = vpack.c.b16 %v1335, %v1335
          %v1394 = vpack.c.b16 %v1336, %v1336
          %v1395 = vpack.c.b16 %v1337, %v1337
          %v1396 = vpack.c.b16 %v1338, %v1338
          %v1397 = vpack.c.b16 %v1339, %v1339
          %v1398 = vpack.c.b16 %v1340, %v1340
          %v1399 = vpack.c.b16 %v1341, %v1341
          %v1400 = vpack.c.b16 %v1342, %v1342
          %v1401 = vpack.c.b16 %v1343, %v1343
          %v1402 = vpack.c.b16 %v1344, %v1344
          %v1403 = vpack.c.b16 %v1345, %v1345
          %v1404 = vpack.c.b16 %v1346, %v1346
          %v1405 = vpack.c.b16 %v1347, %v1347
          %v1406 = vpack.c.b16 %v1348, %v1348
          %v1407 = vpack.c.b16 %v1349, %v1349
          %v1408 = vpack.c.b16 %v1350, %v1350
          %v1409 = vpack.c.b16 %v1351, %v1351
          %v1410 = vpack.c.b16 %v1352, %v1352
          %v1411 = vpack.c.b16 %v1353, %v1353
          %1470 = vst [vmem:[%s249] sm:$0xf] %v1354
          %1471 = vst [vmem:[%s249 + $0x4] sm:$0xf] %v1355
          %1472 = vst [vmem:[%s249 + $0x8] sm:$0xf] %v1356
          %1473 = vst [vmem:[%s249 + $0xc] sm:$0xf] %v1357
          %1474 = vst [vmem:[%s249 + $0x10] sm:$0xf] %v1358
          %1475 = vst [vmem:[%s249 + $0x14] sm:$0xf] %v1359
          %1476 = vst [vmem:[%s249 + $0x18] sm:$0xf] %v1360
          %1477 = vst [vmem:[%s249 + $0x1c] sm:$0xf] %v1361
          %1478 = vst [vmem:[%s249 + $0x20] sm:$0xf] %v1362
          %1479 = vst [vmem:[%s249 + $0x24] sm:$0xf] %v1363
          %1480 = vst [vmem:[%s249 + $0x28] sm:$0xf] %v1364
          %1481 = vst [vmem:[%s249 + $0x2c] sm:$0xf] %v1365
          %1482 = vst [vmem:[%s249 + $0x30] sm:$0xf] %v1366
          %1483 = vst [vmem:[%s249 + $0x34] sm:$0xf] %v1367
          %1484 = vst [vmem:[%s249 + $0x38] sm:$0xf] %v1368
          %1485 = vst [vmem:[%s249 + $0x3c] sm:$0xf] %v1369
          %1486 = vst [vmem:[%s249 + $0x40] sm:$0xf] %v1370
          %1487 = vst [vmem:[%s249 + $0x44] sm:$0xf] %v1371
          %1488 = vst [vmem:[%s249 + $0x48] sm:$0xf] %v1372
          %1489 = vst [vmem:[%s249 + $0x4c] sm:$0xf] %v1373
          %1490 = vst [vmem:[%s249 + $0x50] sm:$0xf] %v1374
          %1491 = vst [vmem:[%s249 + $0x54] sm:$0xf] %v1375
          %1492 = vst [vmem:[%s249 + $0x58] sm:$0xf] %v1376
          %1493 = vst [vmem:[%s249 + $0x5c] sm:$0xf] %v1377
          %1494 = vst [vmem:[%s249 + $0x60] sm:$0xf] %v1378
          %1495 = vst [vmem:[%s249 + $0x64] sm:$0xf] %v1379
          %1496 = vst [vmem:[%s249 + $0x68] sm:$0xf] %v1380
          %1497 = vst [vmem:[%s249 + $0x6c] sm:$0xf] %v1381
          %1498 = vst [vmem:[%s249 + $0x70] sm:$0xf] %v1382
          %1499 = vst [vmem:[%s249 + $0x74] sm:$0xf] %v1383
          %1500 = vst [vmem:[%s249 + $0x78] sm:$0xf] %v1384
          %1501 = vst [vmem:[%s249 + $0x7c] sm:$0xf] %v1385
          %1502 = vst [vmem:[%s249 + $0x80] sm:$0xf] %v1386
          %1503 = vst [vmem:[%s249 + $0x84] sm:$0xf] %v1387
          %1504 = vst [vmem:[%s249 + $0x88] sm:$0xf] %v1388
          %1505 = vst [vmem:[%s249 + $0x8c] sm:$0xf] %v1389
          %1506 = vst [vmem:[%s249 + $0x90] sm:$0xf] %v1390
          %1507 = vst [vmem:[%s249 + $0x94] sm:$0xf] %v1391
          %1508 = vst [vmem:[%s249 + $0x98] sm:$0xf] %v1392
          %1509 = vst [vmem:[%s249 + $0x9c] sm:$0xf] %v1393
          %1510 = vst [vmem:[%s249 + $0xa0] sm:$0xf] %v1394
          %1511 = vst [vmem:[%s249 + $0xa4] sm:$0xf] %v1395
          %1512 = vst [vmem:[%s249 + $0xa8] sm:$0xf] %v1396
          %1513 = vst [vmem:[%s249 + $0xac] sm:$0xf] %v1397
          %1514 = vst [vmem:[%s249 + $0xb0] sm:$0xf] %v1398
          %1515 = vst [vmem:[%s249 + $0xb4] sm:$0xf] %v1399
          %1516 = vst [vmem:[%s249 + $0xb8] sm:$0xf] %v1400
          %1517 = vst [vmem:[%s249 + $0xbc] sm:$0xf] %v1401
          %1518 = vst [vmem:[%s249 + $0xc0] sm:$0xf] %v1402
          %1519 = vst [vmem:[%s249 + $0xc4] sm:$0xf] %v1403
          %1520 = vst [vmem:[%s249 + $0xc8] sm:$0xf] %v1404
          %1521 = vst [vmem:[%s249 + $0xcc] sm:$0xf] %v1405
          %1522 = vst [vmem:[%s249 + $0xd0] sm:$0xf] %v1406
          %1523 = vst [vmem:[%s249 + $0xd4] sm:$0xf] %v1407
          %1524 = vst [vmem:[%s249 + $0xd8] sm:$0xf] %v1408
          %1525 = vst [vmem:[%s249 + $0xdc] sm:$0xf] %v1409
          %1526 = vst [vmem:[%s249 + $0xe0] sm:$0xf] %v1410
          %1527 = vst [vmem:[%s249 + $0xe4] sm:$0xf] %v1411
        $region48: #{tpu_custom_call.1} parent=31 // pred_fallthru
          _
        %s1528 = sand.u32 %s132, 1
        %s1529 = scalar_lea.sflag [#allocation5], %s1528
        %s1530 = sand.u32 %s132, 1
        %s1531 = smul.addr %s1530, 232
        %s1532 = scalar_lea.vmem [#allocation8], %s1531
        // Predicated region
        $region49: #{tpu_custom_call.1} parent=31 // pred_check
          %p1533 = pneg %p142
        $region50: #{tpu_custom_call.1} parent=31 // pred_check_branch
          %1535 = sbr.rel (%p1533) target = $region52
        $region51: #{tpu_custom_call.1} parent=31 // pred_region
          %s1536 = smul.u32 58, %s26
          %s1538 = ssub.s32 3712, 3712
          %1539 = vsyncadd %s1529, %s1538
          %s1540 = sadd.s32 %s27, %s1536
          %s1541 = smul.addr %s1540, 64
          %s1542 = scalar_lea.hbm %s3, %s1541
          %s1543 = sshll.u32 %s1532, 4
          %s1544 = int_to_ptr.vmem [resolvable:$true] %s1543
          %1549 = dma.vmem_to_hbm [thread:$0]  %s1544, 3712, %s1542, %s1529, 64, 64, 4
        $region52: #{tpu_custom_call.1} parent=31 // pred_fallthru
          _
      $region32: #{tpu_custom_call.1} parent=5 // pred_fallthru
        _
      %p1550 = scmp.le.s32.totalorder 2, %s16
      // Predicated region
      $region53: #{tpu_custom_call.1} parent=5 // pred_check
        %p1551 = pneg %p1550
      $region54: #{tpu_custom_call.1} parent=5 // pred_check_branch
        %1553 = sbr.rel (%p1551) target = $region56
      $region55: #{tpu_custom_call.1} parent=5 // pred_region
        %s1554 = ssub.s32 %s16, 2
        // Predicated region
        $region57: #{tpu_custom_call.1} parent=55 // pred_check
          %p1555 = pneg %p148
        $region58: #{tpu_custom_call.1} parent=55 // pred_check_branch
          %1557 = sbr.rel (%p1555) target = $region60
        $region59: #{tpu_custom_call.1} parent=55 // pred_region
          %s1558 = sand.u32 %s133, 1
          %s1559 = scalar_lea.sflag [#allocation5], %s1558
          %s1560 = sand.u32 %s133, 1
          %s1561 = smul.addr %s1560, 232
          %s1562 = scalar_lea.vmem [#allocation8], %s1561
          %1563 = dma.done %s1559, 3712
        $region60: #{tpu_custom_call.1} parent=55 // pred_fallthru
          _
      $region56: #{tpu_custom_call.1} parent=5 // pred_fallthru
        _
    $region6: #{tpu_custom_call.1} parent=1 // loop_footer
      %s20 = sadd.s32 1, %s16
    $region7: #{tpu_custom_call.1} parent=1 // loop_footer_branch
      %15 = sbr.rel target = $region3
    $region8: #{tpu_custom_call.1} parent=1 // loop_exit
      _
    %1564 = vsyncpa [#allocation4], 1
    %s1565 = scalar_lea.sflag [#allocation4], 1
    %1566 = vsyncpa %s1565, 1
    %1567 = vsyncpa [#allocation7], 1
    %1568 = vsyncpa [#allocation5], 1
    %s1569 = scalar_lea.sflag [#allocation5], 1
    %1570 = vsyncpa %s1569, 1

</llo_original>
